<compile_context>
chip_gen: v7x
topology: tpu7x:2x2x1
jax: 0.10.0
libtpu: 0.0.40
codegen_flags: <defaults>
</compile_context>

<pallas_src>
import functools

import jax
import jax.numpy as jnp
from jax import lax
from jax.experimental import pallas as pl
from jax.experimental.pallas import tpu as pltpu


def _conv_block_kernel(x_ref, w_ref, b_ref, o_ref, *, taps, stride, row_tile,
                       wo, apply_relu):
    """One (batch image, output-row tile) step of Conv2d (+ bias, optional ReLU).

    x_ref: (1, TH_IN, Wp, Cin)         padded-input rows for this tile (incl. halo)
    w_ref: (KH*KW*Cin, Cout_pad)       flattened HWIO weights, Cout zero-padded
    b_ref: (1, Cout_pad)               fp32 bias (zero-padded)
    o_ref: (1, row_tile*Wo, Cout_pad)  fp32 output tile, flattened spatial axis
    """
    kh, kw = taps
    cin = x_ref.shape[-1]

    if stride == 1:
        def window(dh, dw):
            # Static windowed read straight from the ref view (no full-tile
            # load + strided value copies).
            return x_ref[0, pl.ds(dh, row_tile), pl.ds(dw, wo), :]
    else:
        # Strided taps: slice the small resident tile value (proven lowering
        # path for strided windows).
        x_tile = x_ref[0]

        def window(dh, dw):
            return lax.slice(
                x_tile,
                (dh, dw, 0),
                (dh + (row_tile - 1) * stride + 1,
                 dw + (wo - 1) * stride + 1,
                 cin),
                (stride, stride, 1))

    # Per-tile im2col: (row_tile, Wo, KH*KW*Cin) -> (row_tile*Wo, KH*KW*Cin).
    cols = [window(dh, dw) for dh in range(kh) for dw in range(kw)]
    patches = jnp.concatenate(cols, axis=-1).reshape(row_tile * wo, kh * kw * cin)

    # Single MXU contraction with K = KH*KW*Cin, fp32 accumulation.
    acc = jnp.dot(patches, w_ref[...], preferred_element_type=jnp.float32)
    acc = acc + b_ref[...]
    if apply_relu:
        acc = jnp.maximum(acc, 0.0)
    o_ref[0] = acc.astype(o_ref.dtype)


def _pick_row_tile(ho, wo, max_rows=2048):
    """Largest divisor of Ho whose (rows*Wo) flattened-M tile is sublane
    friendly (multiple of 8, or the full image) and not too large."""
    cands = [t for t in range(1, ho + 1)
             if ho % t == 0 and ((t * wo) % 8 == 0 or t == ho)]
    fits = [t for t in cands if t * wo <= max_rows]
    if fits:
        return max(fits)
    return min(cands) if cands else ho


@functools.partial(jax.jit, static_argnames=("stride", "padding", "is_last",
                                             "row_tile", "compute_dtype"))
def conv_block_forward(x_nchw, weight_oihw, bias, *, stride, padding,
                       is_last=False, row_tile=None,
                       compute_dtype=jnp.bfloat16):
    """Forward of Conv_block.  x_nchw: (N, Cin, H, W), weight: (Cout, Cin, KH, KW)."""
    N, Cin, H, W = x_nchw.shape
    Cout, _, KH, KW = weight_oihw.shape
    Ho = (H + 2 * padding - KH) // stride + 1
    Wo = (W + 2 * padding - KW) // stride + 1
    Hp, Wp = H + 2 * padding, W + 2 * padding
    cout_pad = ((Cout + 127) // 128) * 128          # lane-dense output width

    if row_tile is None:
        row_tile = _pick_row_tile(Ho, Wo)
    if Ho % row_tile != 0:
        raise ValueError(f"row_tile={row_tile} must divide Ho={Ho}")
    nt = Ho // row_tile
    th_in = (row_tile - 1) * stride + KH            # input rows per tile (halo incl.)

    # ---- glue, all inside this jit: layout conversion + pad + cast fuse ----
    x_nhwc = jnp.transpose(x_nchw, (0, 2, 3, 1)).astype(compute_dtype)
    x_pad = jnp.pad(x_nhwc, ((0, 0), (padding, padding), (padding, padding), (0, 0)))
    # (Cout, Cin, KH, KW) -> (KH, KW, Cin, Cout) -> (KH*KW*Cin, Cout) -> pad Cout.
    w2d = jnp.transpose(weight_oihw, (2, 3, 1, 0)).reshape(KH * KW * Cin, Cout)
    w2d = jnp.pad(w2d, ((0, 0), (0, cout_pad - Cout))).astype(compute_dtype)
    b2d = jnp.pad(bias.astype(jnp.float32).reshape(1, Cout),
                  ((0, 0), (0, cout_pad - Cout)))

    if nt == 1:
        # Single row tile per image: no halo needed, plain Blocked spec.
        x_spec = pl.BlockSpec((1, Hp, Wp, Cin), lambda n, i: (n, 0, 0, 0))
    else:
        # Overlapping row windows: element-indexed H carrying KH-1 halo rows.
        x_spec = pl.BlockSpec(
            (1, pl.Element(th_in), Wp, Cin),
            lambda n, i: (n, i * row_tile * stride, 0, 0))

    kernel = functools.partial(
        _conv_block_kernel, taps=(KH, KW), stride=stride, row_tile=row_tile,
        wo=Wo, apply_relu=not is_last)

    itemsize = jnp.dtype(compute_dtype).itemsize
    cost = pl.CostEstimate(
        flops=2 * N * Ho * Wo * KH * KW * Cin * Cout,
        transcendentals=0,
        bytes_accessed=(x_pad.size * itemsize + w2d.size * itemsize
                        + b2d.size * 4 + N * Ho * Wo * cout_pad * 4),
    )

    out_flat = pl.pallas_call(
        kernel,
        out_shape=jax.ShapeDtypeStruct((N, Ho * Wo, cout_pad), jnp.float32),
        grid=(N, nt),
        in_specs=[
            x_spec,
            pl.BlockSpec((KH * KW * Cin, cout_pad), lambda n, i: (0, 0)),
            pl.BlockSpec((1, cout_pad), lambda n, i: (0, 0)),
        ],
        out_specs=pl.BlockSpec((1, row_tile * Wo, cout_pad),
                               lambda n, i: (n, i, 0)),
        compiler_params=pltpu.CompilerParams(
            dimension_semantics=("parallel", "parallel"),
            vmem_limit_bytes=32 * 1024 * 1024),
        cost_estimate=cost,
    )(x_pad, w2d, b2d)

    # Un-pad the lane-padded channels and return PyTorch NCHW (fused by XLA).
    out = out_flat[:, :, :Cout].reshape(N, Ho, Wo, Cout)
    return jnp.transpose(out, (0, 3, 1, 2))


def _reference_conv_block(x_nchw, weight_oihw, bias, *, stride, padding,
                          is_last=False):
    out = lax.conv_general_dilated(
        x_nchw.astype(jnp.float32),
        weight_oihw.astype(jnp.float32),
        window_strides=(stride, stride),
        padding=[(padding, padding), (padding, padding)],
        dimension_numbers=("NCHW", "OIHW", "NCHW"),
    )
    out = out + bias.reshape(1, -1, 1, 1)
    if not is_last:
        out = jnp.maximum(out, 0.0)
    return out


if __name__ == "__main__":
    key = jax.random.PRNGKey(0)
    kx, kwt, kb = jax.random.split(key, 3)

    # Conv_block(in_channels=4, out_channels=8, kernel_size=3, ...)
    N, Cin, H, W = 2, 4, 16, 16
    Cout, KH, KW = 8, 3, 3
    fan_in = Cin * KH * KW
    bound = 1.0 / fan_in ** 0.5
    x = jax.random.normal(kx, (N, Cin, H, W), jnp.float32)
    weight = jax.random.uniform(kwt, (Cout, Cin, KH, KW), jnp.float32,
                                minval=-bound, maxval=bound)
    bias = jax.random.uniform(kb, (Cout,), jnp.float32,
                              minval=-bound, maxval=bound)

    def check(stride, padding, is_last, row_tile):
        try:
            out = jax.block_until_ready(conv_block_forward(
                x, weight, bias, stride=stride, padding=padding,
                is_last=is_last, row_tile=row_tile))
        except Exception:
            # Insurance: if the halo (pl.Element) path is unavailable on this
            # jax build, fall back to one row tile per image (plain Blocked).
            out = jax.block_until_ready(conv_block_forward(
                x, weight, bias, stride=stride, padding=padding,
                is_last=is_last, row_tile=None))
        ref = _reference_conv_block(x, weight, bias, stride=stride,
                                    padding=padding, is_last=is_last)
        assert out.shape == ref.shape, (out.shape, ref.shape)
        max_err = float(jnp.max(jnp.abs(out - ref)))
        # bf16 inputs + fp32 accumulation -> loosened tolerance.
        assert jnp.allclose(out, ref, atol=5e-2, rtol=5e-2), max_err

    # Config 1: stride=1, padding=1, ReLU; 4 output-row tiles per image
    # (exercises the multi-tile halo path and the grid pipeline).
    check(stride=1, padding=1, is_last=False, row_tile=4)
    # Config 2: stride=2, padding=1, is_last=True (no ReLU); auto row tiling.
    check(stride=2, padding=1, is_last=True, row_tile=None)

    print("KERNEL_OK")
</pallas_src>

<mosaic_0001>
module attributes {stable_mosaic.version = 11 : i64} {
  func.func @_conv_block_kernel(%arg0: i32, %arg1: i32, %arg2: memref<1x18x18x4xbf16, #tpu.memory_space<vmem>>, %arg3: memref<36x128xbf16, #tpu.memory_space<vmem>>, %arg4: memref<1x128xf32, #tpu.memory_space<vmem>>, %arg5: memref<1x256x128xf32, #tpu.memory_space<vmem>>) attributes {dimension_semantics = [#tpu.dimension_semantics<parallel>, #tpu.dimension_semantics<parallel>], iteration_bounds = array<i64: 2, 1>, scalar_prefetch = 0 : i64, scratch_operands = 0 : i64, tpu.core_type = #tpu.core_type<tc>, window_params = [{transform_indices = @transform_0, window_bounds = array<i64: 1, 18, 18, 4>}, {pipeline_mode = #tpu.pipeline_mode<synchronous>, transform_indices = @transform_1, window_bounds = array<i64: 36, 128>}, {pipeline_mode = #tpu.pipeline_mode<synchronous>, transform_indices = @transform_2, window_bounds = array<i64: 1, 128>}, {transform_indices = @transform_3, window_bounds = array<i64: 1, 256, 128>}]} {
    %c0 = arith.constant 0 : index
    %c0_0 = arith.constant 0 : index
    %c0_1 = arith.constant 0 : index
    %c0_2 = arith.constant 0 : index
    %0 = vector.load %arg2[%c0, %c0_0, %c0_1, %c0_2] : memref<1x18x18x4xbf16, #tpu.memory_space<vmem>>, vector<1x16x16x4xbf16>
    %1 = vector.shape_cast %0 : vector<1x16x16x4xbf16> to vector<16x16x4xbf16>
    %c0_3 = arith.constant 0 : index
    %c0_4 = arith.constant 0 : index
    %c1 = arith.constant 1 : index
    %c0_5 = arith.constant 0 : index
    %2 = vector.load %arg2[%c0_3, %c0_4, %c1, %c0_5] : memref<1x18x18x4xbf16, #tpu.memory_space<vmem>>, vector<1x16x16x4xbf16>
    %3 = vector.shape_cast %2 : vector<1x16x16x4xbf16> to vector<16x16x4xbf16>
    %c0_6 = arith.constant 0 : index
    %c0_7 = arith.constant 0 : index
    %c2 = arith.constant 2 : index
    %c0_8 = arith.constant 0 : index
    %4 = vector.load %arg2[%c0_6, %c0_7, %c2, %c0_8] : memref<1x18x18x4xbf16, #tpu.memory_space<vmem>>, vector<1x16x16x4xbf16>
    %5 = vector.shape_cast %4 : vector<1x16x16x4xbf16> to vector<16x16x4xbf16>
    %c0_9 = arith.constant 0 : index
    %c1_10 = arith.constant 1 : index
    %c0_11 = arith.constant 0 : index
    %c0_12 = arith.constant 0 : index
    %6 = vector.load %arg2[%c0_9, %c1_10, %c0_11, %c0_12] : memref<1x18x18x4xbf16, #tpu.memory_space<vmem>>, vector<1x16x16x4xbf16>
    %7 = vector.shape_cast %6 : vector<1x16x16x4xbf16> to vector<16x16x4xbf16>
    %c0_13 = arith.constant 0 : index
    %c1_14 = arith.constant 1 : index
    %c1_15 = arith.constant 1 : index
    %c0_16 = arith.constant 0 : index
    %8 = vector.load %arg2[%c0_13, %c1_14, %c1_15, %c0_16] : memref<1x18x18x4xbf16, #tpu.memory_space<vmem>>, vector<1x16x16x4xbf16>
    %9 = vector.shape_cast %8 : vector<1x16x16x4xbf16> to vector<16x16x4xbf16>
    %c0_17 = arith.constant 0 : index
    %c1_18 = arith.constant 1 : index
    %c2_19 = arith.constant 2 : index
    %c0_20 = arith.constant 0 : index
    %10 = vector.load %arg2[%c0_17, %c1_18, %c2_19, %c0_20] : memref<1x18x18x4xbf16, #tpu.memory_space<vmem>>, vector<1x16x16x4xbf16>
    %11 = vector.shape_cast %10 : vector<1x16x16x4xbf16> to vector<16x16x4xbf16>
    %c0_21 = arith.constant 0 : index
    %c2_22 = arith.constant 2 : index
    %c0_23 = arith.constant 0 : index
    %c0_24 = arith.constant 0 : index
    %12 = vector.load %arg2[%c0_21, %c2_22, %c0_23, %c0_24] : memref<1x18x18x4xbf16, #tpu.memory_space<vmem>>, vector<1x16x16x4xbf16>
    %13 = vector.shape_cast %12 : vector<1x16x16x4xbf16> to vector<16x16x4xbf16>
    %c0_25 = arith.constant 0 : index
    %c2_26 = arith.constant 2 : index
    %c1_27 = arith.constant 1 : index
    %c0_28 = arith.constant 0 : index
    %14 = vector.load %arg2[%c0_25, %c2_26, %c1_27, %c0_28] : memref<1x18x18x4xbf16, #tpu.memory_space<vmem>>, vector<1x16x16x4xbf16>
    %15 = vector.shape_cast %14 : vector<1x16x16x4xbf16> to vector<16x16x4xbf16>
    %c0_29 = arith.constant 0 : index
    %c2_30 = arith.constant 2 : index
    %c2_31 = arith.constant 2 : index
    %c0_32 = arith.constant 0 : index
    %16 = vector.load %arg2[%c0_29, %c2_30, %c2_31, %c0_32] : memref<1x18x18x4xbf16, #tpu.memory_space<vmem>>, vector<1x16x16x4xbf16>
    %17 = vector.shape_cast %16 : vector<1x16x16x4xbf16> to vector<16x16x4xbf16>
    %18 = tpu.concatenate %1, %3, %5, %7, %9, %11, %13, %15, %17 in 2 : vector<16x16x4xbf16>, vector<16x16x4xbf16>, vector<16x16x4xbf16>, vector<16x16x4xbf16>, vector<16x16x4xbf16>, vector<16x16x4xbf16>, vector<16x16x4xbf16>, vector<16x16x4xbf16>, vector<16x16x4xbf16> -> vector<16x16x36xbf16>
    %19 = vector.shape_cast %18 : vector<16x16x36xbf16> to vector<256x36xbf16>
    %c0_33 = arith.constant 0 : index
    %c0_34 = arith.constant 0 : index
    %20 = vector.load %arg3[%c0_33, %c0_34] : memref<36x128xbf16, #tpu.memory_space<vmem>>, vector<36x128xbf16>
    %cst = arith.constant dense<0.000000e+00> : vector<256x128xf32>
    %21 = tpu.matmul %19, %20, %cst {dimension_numbers = #tpu.dot_dimension_numbers<[1], [0], [0], [1], [0, 0, 1, 1], [], []>} : vector<256x36xbf16>, vector<36x128xbf16>, vector<256x128xf32> -> vector<256x128xf32>
    %c0_35 = arith.constant 0 : index
    %c0_36 = arith.constant 0 : index
    %22 = vector.load %arg4[%c0_35, %c0_36] : memref<1x128xf32, #tpu.memory_space<vmem>>, vector<1x128xf32>
    %23 = vector.broadcast %22 : vector<1x128xf32> to vector<256x128xf32>
    %24 = arith.addf %21, %23 : vector<256x128xf32>
    %cst_37 = arith.constant 0.000000e+00 : f32
    %25 = vector.broadcast %cst_37 : f32 to vector<256x128xf32>
    %26 = arith.maximumf %24, %25 : vector<256x128xf32>
    %c0_38 = arith.constant 0 : index
    %c0_39 = arith.constant 0 : index
    %c0_40 = arith.constant 0 : index
    %27 = vector.load %arg5[%c0_38, %c0_39, %c0_40] : memref<1x256x128xf32, #tpu.memory_space<vmem>>, vector<1x256x128xf32>
    %28 = vector.shape_cast %27 : vector<1x256x128xf32> to vector<256x128xf32>
    %29 = vector.shape_cast %26 : vector<256x128xf32> to vector<1x256x128xf32>
    tpu.vector_store %arg5[%c0_38, %c0_39, %c0_40], %29 {strides = array<i32>} : memref<1x256x128xf32, #tpu.memory_space<vmem>>, vector<1x256x128xf32>,
    return
  }
  func.func @transform_0(%arg0: i32, %arg1: i32) -> (i32, i32, i32, i32) {
    %c0_i32 = arith.constant 0 : i32
    %c0_i32_0 = arith.constant 0 : i32
    %c0_i32_1 = arith.constant 0 : i32
    %c0_i32_2 = arith.constant 0 : i32
    return %arg0, %c0_i32, %c0_i32_0, %c0_i32_1 : i32, i32, i32, i32
  }
  func.func @transform_1(%arg0: i32, %arg1: i32) -> (i32, i32) {
    %c0_i32 = arith.constant 0 : i32
    %c0_i32_0 = arith.constant 0 : i32
    %c0_i32_1 = arith.constant 0 : i32
    return %c0_i32, %c0_i32_0 : i32, i32
  }
  func.func @transform_2(%arg0: i32, %arg1: i32) -> (i32, i32) {
    %c0_i32 = arith.constant 0 : i32
    %c0_i32_0 = arith.constant 0 : i32
    %c0_i32_1 = arith.constant 0 : i32
    return %c0_i32, %c0_i32_0 : i32, i32
  }
  func.func @transform_3(%arg0: i32, %arg1: i32) -> (i32, i32, i32) {
    %c0_i32 = arith.constant 0 : i32
    %c0_i32_0 = arith.constant 0 : i32
    return %arg0, %arg1, %c0_i32 : i32, i32, i32
  }
}

</mosaic_0001>

<llo_original>
// kernel: conv_block_forward.1
$region0: #{conv_block_forward.1}
  #allocation0 [shape = 'u32[]', space=smem, size = 0x4, offset = 0x4, fixed_abs, tag = 'smem constant byte address 0x4 - core index']
  #allocation1 [shape = 'u32[144,128]{1,0:T(1,128)}', space=vmem, size = 0x12000, scoped, tag = 'internal scratch']
  %s0 = inlined_call_operand.vmem [shape: bf16[2,18,18,4], index: 0, kind: input, shape index: {}]
  %s1 = inlined_call_operand.vmem [shape: bf16[36,128], index: 1, kind: input, shape index: {}]
  %s2 = inlined_call_operand.vmem [shape: f32[1,128], index: 2, kind: input, shape index: {}]
  %s3 = inlined_call_operand.vmem [shape: f32[2,256,128], index: 3, kind: output, shape index: {}]
  %s4 = sld [smem:[#allocation0]]
  $region45: #{conv_block_forward.1} parent=0
    _
  %s6 = ssub.s32 1, %s4
  %s7 = scalar_select 0, %s6, %s4
  loop: start=0, step=1, limit=4
  $region2: #{conv_block_forward.1} parent=0 // loop_pre_header
    _
  $region3: #{conv_block_forward.1} parent=0 // loop_header
    %s9 = sphi 0, %s13
    %p10 = scmp.ge.s32.totalorder %s9, 4
    %s16 = sphi 0, %s28
    %s17 = sphi 0, %s24
    %s18 = sphi 0, %s16
    %s19 = sphi 0, %s17
    %s20 = sphi 0, %s18
    %s21 = sphi 0, %s19
    %s31 = sphi 0, %s33
    %s34 = sphi 0, %s31
    %s35 = sphi 0, %s34
    %s51 = sphi 0, %s35
    %s55 = sphi 0, %s55
    %s57 = sphi 0, %s55
    %s58 = sphi 0, %s57
    %s72 = sphi 0, %s58
    %s76 = sphi 0, %s76
    %s78 = sphi 0, %s76
    %s79 = sphi 0, %s78
    %s93 = sphi 0, %s79
    %s101 = sphi 0, %s103
    %s104 = sphi 0, %s101
    %s105 = sphi 0, %s104
    %s121 = sphi 0, %s105
  $region4: #{conv_block_forward.1} parent=0 // loop_header_branch
    %12 = sbr.rel (%p10) target = $region8
  $region5: #{conv_block_forward.1} parent=0 // loop_body
    %s14 = ssub.s32 %s9, 1
    %s15 = ssub.s32 %s9, 2
    %s22 = sadd.s32 1, %s17
    %p23 = scmp.ge.s32.totalorder %s22, 1
    %s24 = scalar_select %p23, 0, %s22
    %s25 = sadd.s32 1, %s16
    %s26 = scalar_select %p23, %s25, %s16
    %p27 = scmp.ge.s32.totalorder %s26, 2
    %s28 = scalar_select %p27, 0, %s26
    %s29 = ssub.s32 %s16, %s28
    %p30 = scmp.eq.s32.totalorder %s29, 0
    %s32 = sadd.s32 %s31, 1
    %s33 = scalar_select %p30, %s31, %s32
    %p36 = pneg %p30
    %p37 = scmp.eq.s32.totalorder %s9, 1
    %p38 = por %p36, %p37
    %p39 = scmp.ne.s32.totalorder %s31, %s34
    %p40 = scmp.eq.s32.totalorder %s9, 0
    %p41 = por %p39, %p40
    %p42 = scmp.ne.s32.totalorder %s31, %s34
    %p43 = scmp.eq.s32.totalorder %s14, 1
    %p44 = por %p42, %p43
    %p45 = scmp.ne.s32.totalorder %s34, %s35
    %p46 = scmp.eq.s32.totalorder %s14, 0
    %p47 = por %p45, %p46
    %p48 = scmp.ne.s32.totalorder %s34, %s35
    %p49 = scmp.eq.s32.totalorder %s15, 1
    %p50 = por %p48, %p49
    %p52 = scmp.ne.s32.totalorder %s35, %s51
    %p53 = scmp.eq.s32.totalorder %s15, 0
    %p54 = por %p52, %p53
    %s56 = sadd.s32 %s55, 1
    %p59 = scmp.eq.s32.totalorder %s9, 1
    %p60 = scmp.ne.s32.totalorder %s55, %s57
    %p61 = scmp.eq.s32.totalorder %s9, 0
    %p62 = por %p60, %p61
    %p63 = scmp.ne.s32.totalorder %s55, %s57
    %p64 = scmp.eq.s32.totalorder %s14, 1
    %p65 = por %p63, %p64
    %p66 = scmp.ne.s32.totalorder %s57, %s58
    %p67 = scmp.eq.s32.totalorder %s14, 0
    %p68 = por %p66, %p67
    %p69 = scmp.ne.s32.totalorder %s57, %s58
    %p70 = scmp.eq.s32.totalorder %s15, 1
    %p71 = por %p69, %p70
    %p73 = scmp.ne.s32.totalorder %s58, %s72
    %p74 = scmp.eq.s32.totalorder %s15, 0
    %p75 = por %p73, %p74
    %s77 = sadd.s32 %s76, 1
    %p80 = scmp.eq.s32.totalorder %s9, 1
    %p81 = scmp.ne.s32.totalorder %s76, %s78
    %p82 = scmp.eq.s32.totalorder %s9, 0
    %p83 = por %p81, %p82
    %p84 = scmp.ne.s32.totalorder %s76, %s78
    %p85 = scmp.eq.s32.totalorder %s14, 1
    %p86 = por %p84, %p85
    %p87 = scmp.ne.s32.totalorder %s78, %s79
    %p88 = scmp.eq.s32.totalorder %s14, 0
    %p89 = por %p87, %p88
    %p90 = scmp.ne.s32.totalorder %s78, %s79
    %p91 = scmp.eq.s32.totalorder %s15, 1
    %p92 = por %p90, %p91
    %p94 = scmp.ne.s32.totalorder %s79, %s93
    %p95 = scmp.eq.s32.totalorder %s15, 0
    %p96 = por %p94, %p95
    %s97 = ssub.s32 %s16, %s28
    %s98 = ssub.s32 %s17, %s24
    %s99 = sor.u32 %s97, %s98
    %p100 = scmp.eq.s32.totalorder %s99, 0
    %s102 = sadd.s32 %s101, 1
    %s103 = scalar_select %p100, %s101, %s102
    %p106 = pneg %p100
    %p107 = scmp.eq.s32.totalorder %s9, 1
    %p108 = por %p106, %p107
    %p109 = scmp.ne.s32.totalorder %s101, %s104
    %p110 = scmp.eq.s32.totalorder %s9, 0
    %p111 = por %p109, %p110
    %p112 = scmp.ne.s32.totalorder %s101, %s104
    %p113 = scmp.eq.s32.totalorder %s14, 1
    %p114 = por %p112, %p113
    %p115 = scmp.ne.s32.totalorder %s104, %s105
    %p116 = scmp.eq.s32.totalorder %s14, 0
    %p117 = por %p115, %p116
    %p118 = scmp.ne.s32.totalorder %s104, %s105
    %p119 = scmp.eq.s32.totalorder %s15, 1
    %p120 = por %p118, %p119
    %p122 = scmp.ne.s32.totalorder %s105, %s121
    %p123 = scmp.eq.s32.totalorder %s15, 0
    %p124 = por %p122, %p123
    %p125 = scmp.le.s32.totalorder 1, %s9
    %p126 = scmp.lt.s32.totalorder %s9, 3
    %p127 = pnand %p125, %p126
    %p128 = pneg %p127
    // Predicated region
    $region9: #{conv_block_forward.1} parent=5 // pred_check
      _
    $region10: #{conv_block_forward.1} parent=5 // pred_check_branch
      %130 = sbr.rel (%p127) target = $region12
    $region11: #{conv_block_forward.1} parent=5 // pred_region
      %s131 = ssub.s32 %s9, 1
      // Predicated region
      $region13: #{conv_block_forward.1} parent=11 // pred_check
        %p132 = pneg %p68
      $region14: #{conv_block_forward.1} parent=11 // pred_check_branch
        %134 = sbr.rel (%p132) target = $region16
      $region15: #{conv_block_forward.1} parent=11 // pred_region
        _
      $region16: #{conv_block_forward.1} parent=11 // pred_fallthru
        _
      // Predicated region
      $region17: #{conv_block_forward.1} parent=11 // pred_check
        %p135 = pneg %p89
      $region18: #{conv_block_forward.1} parent=11 // pred_check_branch
        %137 = sbr.rel (%p135) target = $region20
      $region19: #{conv_block_forward.1} parent=11 // pred_region
        _
      $region20: #{conv_block_forward.1} parent=11 // pred_fallthru
        _
    $region12: #{conv_block_forward.1} parent=5 // pred_fallthru
      _
    %p138 = scmp.lt.s32.totalorder %s9, 2
    // Predicated region
    $region21: #{conv_block_forward.1} parent=5 // pred_check
      %p139 = pneg %p138
    $region22: #{conv_block_forward.1} parent=5 // pred_check_branch
      %141 = sbr.rel (%p139) target = $region24
    $region23: #{conv_block_forward.1} parent=5 // pred_region
      // Predicated region
      $region25: #{conv_block_forward.1} parent=23 // pred_check
        %p142 = pneg %p41
      $region26: #{conv_block_forward.1} parent=23 // pred_check_branch
        %144 = sbr.rel (%p142) target = $region28
      $region27: #{conv_block_forward.1} parent=23 // pred_region
        %p145 = scmp.lt.s32.totalorder %s16, 1
        %s146 = scalar_select %p145, %s16, 1
        %s147 = smul.addr %s146, 54
        %s148 = smul.addr %s147, 4
        %s149 = scalar_lea.vmem %s0, %s148
      $region28: #{conv_block_forward.1} parent=23 // pred_fallthru
        _
    $region24: #{conv_block_forward.1} parent=5 // pred_fallthru
      _
    %p150 = scmp.le.s32.totalorder 1, %s9
    %p151 = scmp.lt.s32.totalorder %s9, 3
    %p152 = pnand %p150, %p151
    %p153 = pneg %p152
    // Predicated region
    $region29: #{conv_block_forward.1} parent=5 // pred_check
      _
    $region30: #{conv_block_forward.1} parent=5 // pred_check_branch
      %155 = sbr.rel (%p152) target = $region32
    $region31: #{conv_block_forward.1} parent=5 // pred_region
      %s156 = ssub.s32 %s9, 1
      %p157 = scmp.lt.s32.totalorder %s18, 1
      %s158 = scalar_select %p157, %s18, 1
      %s159 = smul.addr %s158, 54
      %s160 = smul.addr %s159, 4
      %s161 = scalar_lea.vmem %s0, %s160
      %p162 = pneg %p47
      %p163 = pneg %p44
      %p164 = pneg %p68
      %p165 = pneg %p65
      %p166 = pneg %p89
      %p167 = pneg %p86
      %p168 = pneg %p117
      %p169 = pneg %p114
      %s170 = smul.u32 32, %s19
      %p171 = scmp.lt.s32.totalorder %s18, 1
      %s172 = scalar_select %p171, %s18, 1
      %p173 = scmp.lt.s32.totalorder %s170, 31
      %s174 = scalar_select %p173, %s170, 31
      %s175 = smul.addr %s172, 32
      %s176 = sadd.s32 %s174, %s175
      %s177 = smul.addr %s176, 8
      %s178 = scalar_lea.vmem %s3, %s177
      %p179 = scmp.lt.s32.totalorder %s18, 1
      %s180 = scalar_select %p179, %s18, 1
      %s181 = smul.addr %s180, 54
      %s182 = smul.addr %s181, 4
      %s183 = scalar_lea.vmem %s0, %s182
      %s184 = smul.u32 32, %s19
      %p185 = scmp.lt.s32.totalorder %s18, 1
      %s186 = scalar_select %p185, %s18, 1
      %p187 = scmp.lt.s32.totalorder %s184, 31
      %s188 = scalar_select %p187, %s184, 31
      %s189 = smul.addr %s186, 32
      %s190 = sadd.s32 %s188, %s189
      %s191 = smul.addr %s190, 8
      %s192 = scalar_lea.vmem %s3, %s191
      %s193 = smul.u32 32, %s19
      %v195 = vld [vmem:[%s183] sm:$0xf]
      %v196 = vld [vmem:[%s183 + $0x4] sm:$0xf]
      %v197 = vld [vmem:[%s183 + $0xc] sm:$0xf]
      %v198 = vld [vmem:[%s183 + $0x10] sm:$0xf]
      %v199 = vld [vmem:[%s183 + $0x18] sm:$0xf]
      %v200 = vld [vmem:[%s183 + $0x1c] sm:$0xf]
      %v201 = vld [vmem:[%s183 + $0x24] sm:$0xf]
      %v202 = vld [vmem:[%s183 + $0x28] sm:$0xf]
      %v203 = vld [vmem:[%s183 + $0x30] sm:$0xf]
      %v204 = vld [vmem:[%s183 + $0x34] sm:$0xf]
      %v205 = vld [vmem:[%s183 + $0x3c] sm:$0xf]
      %v206 = vld [vmem:[%s183 + $0x40] sm:$0xf]
      %v207 = vld [vmem:[%s183 + $0x48] sm:$0xf]
      %v208 = vld [vmem:[%s183 + $0x4c] sm:$0xf]
      %v209 = vld [vmem:[%s183 + $0x54] sm:$0xf]
      %v210 = vld [vmem:[%s183 + $0x58] sm:$0xf]
      %v211 = vld [vmem:[%s183 + $0x60] sm:$0xf]
      %v212 = vld [vmem:[%s183 + $0x64] sm:$0xf]
      %v213 = vld [vmem:[%s183 + $0x6c] sm:$0xf]
      %v214 = vld [vmem:[%s183 + $0x70] sm:$0xf]
      %v215 = vld [vmem:[%s183 + $0x78] sm:$0xf]
      %v216 = vld [vmem:[%s183 + $0x7c] sm:$0xf]
      %v217 = vld [vmem:[%s183 + $0x84] sm:$0xf]
      %v218 = vld [vmem:[%s183 + $0x88] sm:$0xf]
      %v219 = vld [vmem:[%s183 + $0x90] sm:$0xf]
      %v220 = vld [vmem:[%s183 + $0x94] sm:$0xf]
      %v221 = vld [vmem:[%s183 + $0x9c] sm:$0xf]
      %v222 = vld [vmem:[%s183 + $0xa0] sm:$0xf]
      %v223 = vld [vmem:[%s183 + $0xa8] sm:$0xf]
      %v224 = vld [vmem:[%s183 + $0xac] sm:$0xf]
      %v225 = vld [vmem:[%s183 + $0xb4] sm:$0xf]
      %v226 = vld [vmem:[%s183 + $0xb8] sm:$0xf]
      %v227 = vld [vmem:[%s183 + $0x8] sm:$0x1]
      %v228 = vld [vmem:[%s183 + $0x14] sm:$0x1]
      %v229 = vld [vmem:[%s183 + $0x20] sm:$0x1]
      %v230 = vld [vmem:[%s183 + $0x2c] sm:$0x1]
      %v231 = vld [vmem:[%s183 + $0x38] sm:$0x1]
      %v232 = vld [vmem:[%s183 + $0x44] sm:$0x1]
      %v233 = vld [vmem:[%s183 + $0x50] sm:$0x1]
      %v234 = vld [vmem:[%s183 + $0x5c] sm:$0x1]
      %v235 = vld [vmem:[%s183 + $0x68] sm:$0x1]
      %v236 = vld [vmem:[%s183 + $0x74] sm:$0x1]
      %v237 = vld [vmem:[%s183 + $0x80] sm:$0x1]
      %v238 = vld [vmem:[%s183 + $0x8c] sm:$0x1]
      %v239 = vld [vmem:[%s183 + $0x98] sm:$0x1]
      %v240 = vld [vmem:[%s183 + $0xa4] sm:$0x1]
      %v241 = vld [vmem:[%s183 + $0xb0] sm:$0x1]
      %v242 = vld [vmem:[%s183 + $0xbc] sm:$0x1]
      %v243 = vld [vmem:[%s183] sm:$0xe]
      %v244 = vld [vmem:[%s183 + $0xc] sm:$0xe]
      %v245 = vld [vmem:[%s183 + $0x18] sm:$0xe]
      %v246 = vld [vmem:[%s183 + $0x24] sm:$0xe]
      %v247 = vld [vmem:[%s183 + $0x30] sm:$0xe]
      %v248 = vld [vmem:[%s183 + $0x3c] sm:$0xe]
      %v249 = vld [vmem:[%s183 + $0x48] sm:$0xe]
      %v250 = vld [vmem:[%s183 + $0x54] sm:$0xe]
      %v251 = vld [vmem:[%s183 + $0x60] sm:$0xe]
      %v252 = vld [vmem:[%s183 + $0x6c] sm:$0xe]
      %v253 = vld [vmem:[%s183 + $0x78] sm:$0xe]
      %v254 = vld [vmem:[%s183 + $0x84] sm:$0xe]
      %v255 = vld [vmem:[%s183 + $0x90] sm:$0xe]
      %v256 = vld [vmem:[%s183 + $0x9c] sm:$0xe]
      %v257 = vld [vmem:[%s183 + $0xa8] sm:$0xe]
      %v258 = vld [vmem:[%s183 + $0xb4] sm:$0xe]
      %s259 = scalar_lea.vmem %s183, 12
      %v260 = vld [vmem:[%s259] sm:$0xf]
      %v261 = vld [vmem:[%s259 + $0x4] sm:$0xf]
      %v262 = vld [vmem:[%s259 + $0xc] sm:$0xf]
      %v263 = vld [vmem:[%s259 + $0x10] sm:$0xf]
      %v264 = vld [vmem:[%s259 + $0x18] sm:$0xf]
      %v265 = vld [vmem:[%s259 + $0x1c] sm:$0xf]
      %v266 = vld [vmem:[%s259 + $0x24] sm:$0xf]
      %v267 = vld [vmem:[%s259 + $0x28] sm:$0xf]
      %v268 = vld [vmem:[%s259 + $0x30] sm:$0xf]
      %v269 = vld [vmem:[%s259 + $0x34] sm:$0xf]
      %v270 = vld [vmem:[%s259 + $0x3c] sm:$0xf]
      %v271 = vld [vmem:[%s259 + $0x40] sm:$0xf]
      %v272 = vld [vmem:[%s259 + $0x48] sm:$0xf]
      %v273 = vld [vmem:[%s259 + $0x4c] sm:$0xf]
      %v274 = vld [vmem:[%s259 + $0x54] sm:$0xf]
      %v275 = vld [vmem:[%s259 + $0x58] sm:$0xf]
      %v276 = vld [vmem:[%s259 + $0x60] sm:$0xf]
      %v277 = vld [vmem:[%s259 + $0x64] sm:$0xf]
      %v278 = vld [vmem:[%s259 + $0x6c] sm:$0xf]
      %v279 = vld [vmem:[%s259 + $0x70] sm:$0xf]
      %v280 = vld [vmem:[%s259 + $0x78] sm:$0xf]
      %v281 = vld [vmem:[%s259 + $0x7c] sm:$0xf]
      %v282 = vld [vmem:[%s259 + $0x84] sm:$0xf]
      %v283 = vld [vmem:[%s259 + $0x88] sm:$0xf]
      %v284 = vld [vmem:[%s259 + $0x90] sm:$0xf]
      %v285 = vld [vmem:[%s259 + $0x94] sm:$0xf]
      %v286 = vld [vmem:[%s259 + $0x9c] sm:$0xf]
      %v287 = vld [vmem:[%s259 + $0xa0] sm:$0xf]
      %v288 = vld [vmem:[%s259 + $0xa8] sm:$0xf]
      %v289 = vld [vmem:[%s259 + $0xac] sm:$0xf]
      %v290 = vld [vmem:[%s259 + $0xb4] sm:$0xf]
      %v291 = vld [vmem:[%s259 + $0xb8] sm:$0xf]
      %v292 = vld [vmem:[%s259 + $0x8] sm:$0x1]
      %v293 = vld [vmem:[%s259 + $0x14] sm:$0x1]
      %v294 = vld [vmem:[%s259 + $0x20] sm:$0x1]
      %v295 = vld [vmem:[%s259 + $0x2c] sm:$0x1]
      %v296 = vld [vmem:[%s259 + $0x38] sm:$0x1]
      %v297 = vld [vmem:[%s259 + $0x44] sm:$0x1]
      %v298 = vld [vmem:[%s259 + $0x50] sm:$0x1]
      %v299 = vld [vmem:[%s259 + $0x5c] sm:$0x1]
      %v300 = vld [vmem:[%s259 + $0x68] sm:$0x1]
      %v301 = vld [vmem:[%s259 + $0x74] sm:$0x1]
      %v302 = vld [vmem:[%s259 + $0x80] sm:$0x1]
      %v303 = vld [vmem:[%s259 + $0x8c] sm:$0x1]
      %v304 = vld [vmem:[%s259 + $0x98] sm:$0x1]
      %v305 = vld [vmem:[%s259 + $0xa4] sm:$0x1]
      %v306 = vld [vmem:[%s259 + $0xb0] sm:$0x1]
      %v307 = vld [vmem:[%s259 + $0xbc] sm:$0x1]
      %v308 = vld [vmem:[%s259] sm:$0xe]
      %v309 = vld [vmem:[%s259 + $0xc] sm:$0xe]
      %v310 = vld [vmem:[%s259 + $0x18] sm:$0xe]
      %v311 = vld [vmem:[%s259 + $0x24] sm:$0xe]
      %v312 = vld [vmem:[%s259 + $0x30] sm:$0xe]
      %v313 = vld [vmem:[%s259 + $0x3c] sm:$0xe]
      %v314 = vld [vmem:[%s259 + $0x48] sm:$0xe]
      %v315 = vld [vmem:[%s259 + $0x54] sm:$0xe]
      %v316 = vld [vmem:[%s259 + $0x60] sm:$0xe]
      %v317 = vld [vmem:[%s259 + $0x6c] sm:$0xe]
      %v318 = vld [vmem:[%s259 + $0x78] sm:$0xe]
      %v319 = vld [vmem:[%s259 + $0x84] sm:$0xe]
      %v320 = vld [vmem:[%s259 + $0x90] sm:$0xe]
      %v321 = vld [vmem:[%s259 + $0x9c] sm:$0xe]
      %v322 = vld [vmem:[%s259 + $0xa8] sm:$0xe]
      %v323 = vld [vmem:[%s259 + $0xb4] sm:$0xe]
      %s324 = scalar_lea.vmem %s183, 24
      %v325 = vld [vmem:[%s324] sm:$0xf]
      %v326 = vld [vmem:[%s324 + $0x4] sm:$0xf]
      %v327 = vld [vmem:[%s324 + $0xc] sm:$0xf]
      %v328 = vld [vmem:[%s324 + $0x10] sm:$0xf]
      %v329 = vld [vmem:[%s324 + $0x18] sm:$0xf]
      %v330 = vld [vmem:[%s324 + $0x1c] sm:$0xf]
      %v331 = vld [vmem:[%s324 + $0x24] sm:$0xf]
      %v332 = vld [vmem:[%s324 + $0x28] sm:$0xf]
      %v333 = vld [vmem:[%s324 + $0x30] sm:$0xf]
      %v334 = vld [vmem:[%s324 + $0x34] sm:$0xf]
      %v335 = vld [vmem:[%s324 + $0x3c] sm:$0xf]
      %v336 = vld [vmem:[%s324 + $0x40] sm:$0xf]
      %v337 = vld [vmem:[%s324 + $0x48] sm:$0xf]
      %v338 = vld [vmem:[%s324 + $0x4c] sm:$0xf]
      %v339 = vld [vmem:[%s324 + $0x54] sm:$0xf]
      %v340 = vld [vmem:[%s324 + $0x58] sm:$0xf]
      %v341 = vld [vmem:[%s324 + $0x60] sm:$0xf]
      %v342 = vld [vmem:[%s324 + $0x64] sm:$0xf]
      %v343 = vld [vmem:[%s324 + $0x6c] sm:$0xf]
      %v344 = vld [vmem:[%s324 + $0x70] sm:$0xf]
      %v345 = vld [vmem:[%s324 + $0x78] sm:$0xf]
      %v346 = vld [vmem:[%s324 + $0x7c] sm:$0xf]
      %v347 = vld [vmem:[%s324 + $0x84] sm:$0xf]
      %v348 = vld [vmem:[%s324 + $0x88] sm:$0xf]
      %v349 = vld [vmem:[%s324 + $0x90] sm:$0xf]
      %v350 = vld [vmem:[%s324 + $0x94] sm:$0xf]
      %v351 = vld [vmem:[%s324 + $0x9c] sm:$0xf]
      %v352 = vld [vmem:[%s324 + $0xa0] sm:$0xf]
      %v353 = vld [vmem:[%s324 + $0xa8] sm:$0xf]
      %v354 = vld [vmem:[%s324 + $0xac] sm:$0xf]
      %v355 = vld [vmem:[%s324 + $0xb4] sm:$0xf]
      %v356 = vld [vmem:[%s324 + $0xb8] sm:$0xf]
      %v357 = vld [vmem:[%s324 + $0x8] sm:$0x1]
      %v358 = vld [vmem:[%s324 + $0x14] sm:$0x1]
      %v359 = vld [vmem:[%s324 + $0x20] sm:$0x1]
      %v360 = vld [vmem:[%s324 + $0x2c] sm:$0x1]
      %v361 = vld [vmem:[%s324 + $0x38] sm:$0x1]
      %v362 = vld [vmem:[%s324 + $0x44] sm:$0x1]
      %v363 = vld [vmem:[%s324 + $0x50] sm:$0x1]
      %v364 = vld [vmem:[%s324 + $0x5c] sm:$0x1]
      %v365 = vld [vmem:[%s324 + $0x68] sm:$0x1]
      %v366 = vld [vmem:[%s324 + $0x74] sm:$0x1]
      %v367 = vld [vmem:[%s324 + $0x80] sm:$0x1]
      %v368 = vld [vmem:[%s324 + $0x8c] sm:$0x1]
      %v369 = vld [vmem:[%s324 + $0x98] sm:$0x1]
      %v370 = vld [vmem:[%s324 + $0xa4] sm:$0x1]
      %v371 = vld [vmem:[%s324 + $0xb0] sm:$0x1]
      %v372 = vld [vmem:[%s324 + $0xbc] sm:$0x1]
      %v373 = vld [vmem:[%s324] sm:$0xe]
      %v374 = vld [vmem:[%s324 + $0xc] sm:$0xe]
      %v375 = vld [vmem:[%s324 + $0x18] sm:$0xe]
      %v376 = vld [vmem:[%s324 + $0x24] sm:$0xe]
      %v377 = vld [vmem:[%s324 + $0x30] sm:$0xe]
      %v378 = vld [vmem:[%s324 + $0x3c] sm:$0xe]
      %v379 = vld [vmem:[%s324 + $0x48] sm:$0xe]
      %v380 = vld [vmem:[%s324 + $0x54] sm:$0xe]
      %v381 = vld [vmem:[%s324 + $0x60] sm:$0xe]
      %v382 = vld [vmem:[%s324 + $0x6c] sm:$0xe]
      %v383 = vld [vmem:[%s324 + $0x78] sm:$0xe]
      %v384 = vld [vmem:[%s324 + $0x84] sm:$0xe]
      %v385 = vld [vmem:[%s324 + $0x90] sm:$0xe]
      %v386 = vld [vmem:[%s324 + $0x9c] sm:$0xe]
      %v387 = vld [vmem:[%s324 + $0xa8] sm:$0xe]
      %v388 = vld [vmem:[%s324 + $0xb4] sm:$0xe]
      %v421 = vunpack.c.l.b16 %v195
      %v422 = vunpack.c.l.b16 %v196
      %v423 = vunpack.c.l.b16 %v197
      %v424 = vunpack.c.l.b16 %v198
      %v425 = vunpack.c.l.b16 %v199
      %v426 = vunpack.c.l.b16 %v200
      %v427 = vunpack.c.l.b16 %v201
      %v428 = vunpack.c.l.b16 %v202
      %v429 = vunpack.c.l.b16 %v203
      %v430 = vunpack.c.l.b16 %v204
      %v431 = vunpack.c.l.b16 %v205
      %v432 = vunpack.c.l.b16 %v206
      %v433 = vunpack.c.l.b16 %v207
      %v434 = vunpack.c.l.b16 %v208
      %v435 = vunpack.c.l.b16 %v209
      %v436 = vunpack.c.l.b16 %v210
      %v437 = vunpack.c.l.b16 %v211
      %v438 = vunpack.c.l.b16 %v212
      %v439 = vunpack.c.l.b16 %v213
      %v440 = vunpack.c.l.b16 %v214
      %v441 = vunpack.c.l.b16 %v215
      %v442 = vunpack.c.l.b16 %v216
      %v443 = vunpack.c.l.b16 %v217
      %v444 = vunpack.c.l.b16 %v218
      %v445 = vunpack.c.l.b16 %v219
      %v446 = vunpack.c.l.b16 %v220
      %v447 = vunpack.c.l.b16 %v221
      %v448 = vunpack.c.l.b16 %v222
      %v449 = vunpack.c.l.b16 %v223
      %v450 = vunpack.c.l.b16 %v224
      %v451 = vunpack.c.l.b16 %v225
      %v452 = vunpack.c.l.b16 %v226
      %v453 = vpack.c.b16 %v422, %v421
      %v454 = vpack.c.b16 %v424, %v423
      %v455 = vpack.c.b16 %v426, %v425
      %v456 = vpack.c.b16 %v428, %v427
      %v457 = vpack.c.b16 %v430, %v429
      %v458 = vpack.c.b16 %v432, %v431
      %v459 = vpack.c.b16 %v434, %v433
      %v460 = vpack.c.b16 %v436, %v435
      %v461 = vpack.c.b16 %v438, %v437
      %v462 = vpack.c.b16 %v440, %v439
      %v463 = vpack.c.b16 %v442, %v441
      %v464 = vpack.c.b16 %v444, %v443
      %v465 = vpack.c.b16 %v446, %v445
      %v466 = vpack.c.b16 %v448, %v447
      %v467 = vpack.c.b16 %v450, %v449
      %v468 = vpack.c.b16 %v452, %v451
      %v485 = vunpack.c.l.b16 %v227
      %v486 = vunpack.c.l.b16 %v228
      %v487 = vunpack.c.l.b16 %v229
      %v488 = vunpack.c.l.b16 %v230
      %v489 = vunpack.c.l.b16 %v231
      %v490 = vunpack.c.l.b16 %v232
      %v491 = vunpack.c.l.b16 %v233
      %v492 = vunpack.c.l.b16 %v234
      %v493 = vunpack.c.l.b16 %v235
      %v494 = vunpack.c.l.b16 %v236
      %v495 = vunpack.c.l.b16 %v237
      %v496 = vunpack.c.l.b16 %v238
      %v497 = vunpack.c.l.b16 %v239
      %v498 = vunpack.c.l.b16 %v240
      %v499 = vunpack.c.l.b16 %v241
      %v500 = vunpack.c.l.b16 %v242
      %v501 = vpack.c.b16 %v485, %v485
      %v502 = vpack.c.b16 %v486, %v486
      %v503 = vpack.c.b16 %v487, %v487
      %v504 = vpack.c.b16 %v488, %v488
      %v505 = vpack.c.b16 %v489, %v489
      %v506 = vpack.c.b16 %v490, %v490
      %v507 = vpack.c.b16 %v491, %v491
      %v508 = vpack.c.b16 %v492, %v492
      %v509 = vpack.c.b16 %v493, %v493
      %v510 = vpack.c.b16 %v494, %v494
      %v511 = vpack.c.b16 %v495, %v495
      %v512 = vpack.c.b16 %v496, %v496
      %v513 = vpack.c.b16 %v497, %v497
      %v514 = vpack.c.b16 %v498, %v498
      %v515 = vpack.c.b16 %v499, %v499
      %v516 = vpack.c.b16 %v500, %v500
      %vm517 = vsmask.f32 7424
      %v519 = vshrl.u32 %v453, 16
      %v521 = vshll.u32 %v453, 16
      %v523 = vrot.slane %v521, 1
      %v524 = vor.u32 %v519, %v523
      %v526 = vshll.u32 %v501, 16
      %v528 = vrot.slane %v526, 1
      %v529 = vsel %vm517, %v524, %v528
      %v531 = vshrl.u32 %v454, 16
      %v533 = vshll.u32 %v454, 16
      %v535 = vrot.slane %v533, 1
      %v536 = vor.u32 %v531, %v535
      %v538 = vshll.u32 %v502, 16
      %v540 = vrot.slane %v538, 1
      %v541 = vsel %vm517, %v536, %v540
      %v543 = vshrl.u32 %v455, 16
      %v545 = vshll.u32 %v455, 16
      %v547 = vrot.slane %v545, 1
      %v548 = vor.u32 %v543, %v547
      %v550 = vshll.u32 %v503, 16
      %v552 = vrot.slane %v550, 1
      %v553 = vsel %vm517, %v548, %v552
      %v555 = vshrl.u32 %v456, 16
      %v557 = vshll.u32 %v456, 16
      %v559 = vrot.slane %v557, 1
      %v560 = vor.u32 %v555, %v559
      %v562 = vshll.u32 %v504, 16
      %v564 = vrot.slane %v562, 1
      %v565 = vsel %vm517, %v560, %v564
      %v567 = vshrl.u32 %v457, 16
      %v569 = vshll.u32 %v457, 16
      %v571 = vrot.slane %v569, 1
      %v572 = vor.u32 %v567, %v571
      %v574 = vshll.u32 %v505, 16
      %v576 = vrot.slane %v574, 1
      %v577 = vsel %vm517, %v572, %v576
      %v579 = vshrl.u32 %v458, 16
      %v581 = vshll.u32 %v458, 16
      %v583 = vrot.slane %v581, 1
      %v584 = vor.u32 %v579, %v583
      %v586 = vshll.u32 %v506, 16
      %v588 = vrot.slane %v586, 1
      %v589 = vsel %vm517, %v584, %v588
      %v591 = vshrl.u32 %v459, 16
      %v593 = vshll.u32 %v459, 16
      %v595 = vrot.slane %v593, 1
      %v596 = vor.u32 %v591, %v595
      %v598 = vshll.u32 %v507, 16
      %v600 = vrot.slane %v598, 1
      %v601 = vsel %vm517, %v596, %v600
      %v603 = vshrl.u32 %v460, 16
      %v605 = vshll.u32 %v460, 16
      %v607 = vrot.slane %v605, 1
      %v608 = vor.u32 %v603, %v607
      %v610 = vshll.u32 %v508, 16
      %v612 = vrot.slane %v610, 1
      %v613 = vsel %vm517, %v608, %v612
      %v615 = vshrl.u32 %v461, 16
      %v617 = vshll.u32 %v461, 16
      %v619 = vrot.slane %v617, 1
      %v620 = vor.u32 %v615, %v619
      %v622 = vshll.u32 %v509, 16
      %v624 = vrot.slane %v622, 1
      %v625 = vsel %vm517, %v620, %v624
      %v627 = vshrl.u32 %v462, 16
      %v629 = vshll.u32 %v462, 16
      %v631 = vrot.slane %v629, 1
      %v632 = vor.u32 %v627, %v631
      %v634 = vshll.u32 %v510, 16
      %v636 = vrot.slane %v634, 1
      %v637 = vsel %vm517, %v632, %v636
      %v639 = vshrl.u32 %v463, 16
      %v641 = vshll.u32 %v463, 16
      %v643 = vrot.slane %v641, 1
      %v644 = vor.u32 %v639, %v643
      %v646 = vshll.u32 %v511, 16
      %v648 = vrot.slane %v646, 1
      %v649 = vsel %vm517, %v644, %v648
      %v651 = vshrl.u32 %v464, 16
      %v653 = vshll.u32 %v464, 16
      %v655 = vrot.slane %v653, 1
      %v656 = vor.u32 %v651, %v655
      %v658 = vshll.u32 %v512, 16
      %v660 = vrot.slane %v658, 1
      %v661 = vsel %vm517, %v656, %v660
      %v663 = vshrl.u32 %v465, 16
      %v665 = vshll.u32 %v465, 16
      %v667 = vrot.slane %v665, 1
      %v668 = vor.u32 %v663, %v667
      %v670 = vshll.u32 %v513, 16
      %v672 = vrot.slane %v670, 1
      %v673 = vsel %vm517, %v668, %v672
      %v675 = vshrl.u32 %v466, 16
      %v677 = vshll.u32 %v466, 16
      %v679 = vrot.slane %v677, 1
      %v680 = vor.u32 %v675, %v679
      %v682 = vshll.u32 %v514, 16
      %v684 = vrot.slane %v682, 1
      %v685 = vsel %vm517, %v680, %v684
      %v687 = vshrl.u32 %v467, 16
      %v689 = vshll.u32 %v467, 16
      %v691 = vrot.slane %v689, 1
      %v692 = vor.u32 %v687, %v691
      %v694 = vshll.u32 %v515, 16
      %v696 = vrot.slane %v694, 1
      %v697 = vsel %vm517, %v692, %v696
      %v699 = vshrl.u32 %v468, 16
      %v701 = vshll.u32 %v468, 16
      %v703 = vrot.slane %v701, 1
      %v704 = vor.u32 %v699, %v703
      %v706 = vshll.u32 %v516, 16
      %v708 = vrot.slane %v706, 1
      %v709 = vsel %vm517, %v704, %v708
      %710 = vrot.lane.b32.xlu0 %v529, 4
      %v711 = vpop.permute.xlu0 %710
      %712 = vrot.lane.b32.xlu0 %v541, 4
      %v713 = vpop.permute.xlu0 %712
      %714 = vrot.lane.b32.xlu0 %v553, 4
      %v715 = vpop.permute.xlu0 %714
      %716 = vrot.lane.b32.xlu0 %v565, 4
      %v717 = vpop.permute.xlu0 %716
      %718 = vrot.lane.b32.xlu0 %v577, 4
      %v719 = vpop.permute.xlu0 %718
      %720 = vrot.lane.b32.xlu0 %v589, 4
      %v721 = vpop.permute.xlu0 %720
      %722 = vrot.lane.b32.xlu0 %v601, 4
      %v723 = vpop.permute.xlu0 %722
      %724 = vrot.lane.b32.xlu0 %v613, 4
      %v725 = vpop.permute.xlu0 %724
      %726 = vrot.lane.b32.xlu0 %v625, 4
      %v727 = vpop.permute.xlu0 %726
      %728 = vrot.lane.b32.xlu0 %v637, 4
      %v729 = vpop.permute.xlu0 %728
      %730 = vrot.lane.b32.xlu0 %v649, 4
      %v731 = vpop.permute.xlu0 %730
      %732 = vrot.lane.b32.xlu0 %v661, 4
      %v733 = vpop.permute.xlu0 %732
      %734 = vrot.lane.b32.xlu0 %v673, 4
      %v735 = vpop.permute.xlu0 %734
      %736 = vrot.lane.b32.xlu0 %v685, 4
      %v737 = vpop.permute.xlu0 %736
      %738 = vrot.lane.b32.xlu0 %v697, 4
      %v739 = vpop.permute.xlu0 %738
      %740 = vrot.lane.b32.xlu0 %v709, 4
      %v741 = vpop.permute.xlu0 %740
      %v758 = vunpack.c.l.b16 %v243
      %v759 = vunpack.c.l.b16 %v244
      %v760 = vunpack.c.l.b16 %v245
      %v761 = vunpack.c.l.b16 %v246
      %v762 = vunpack.c.l.b16 %v247
      %v763 = vunpack.c.l.b16 %v248
      %v764 = vunpack.c.l.b16 %v249
      %v765 = vunpack.c.l.b16 %v250
      %v766 = vunpack.c.l.b16 %v251
      %v767 = vunpack.c.l.b16 %v252
      %v768 = vunpack.c.l.b16 %v253
      %v769 = vunpack.c.l.b16 %v254
      %v770 = vunpack.c.l.b16 %v255
      %v771 = vunpack.c.l.b16 %v256
      %v772 = vunpack.c.l.b16 %v257
      %v773 = vunpack.c.l.b16 %v258
      %v774 = vpack.c.b16 %v422, %v758
      %v775 = vpack.c.b16 %v424, %v759
      %v776 = vpack.c.b16 %v426, %v760
      %v777 = vpack.c.b16 %v428, %v761
      %v778 = vpack.c.b16 %v430, %v762
      %v779 = vpack.c.b16 %v432, %v763
      %v780 = vpack.c.b16 %v434, %v764
      %v781 = vpack.c.b16 %v436, %v765
      %v782 = vpack.c.b16 %v438, %v766
      %v783 = vpack.c.b16 %v440, %v767
      %v784 = vpack.c.b16 %v442, %v768
      %v785 = vpack.c.b16 %v444, %v769
      %v786 = vpack.c.b16 %v446, %v770
      %v787 = vpack.c.b16 %v448, %v771
      %v788 = vpack.c.b16 %v450, %v772
      %v789 = vpack.c.b16 %v452, %v773
      %vm790 = vcmask 1046528
      %v791 = vrot.slane %v774, 1
      %v792 = vrot.slane %v501, 1
      %v793 = vsel %vm790, %v791, %v792
      %v794 = vrot.slane %v775, 1
      %v795 = vrot.slane %v502, 1
      %v796 = vsel %vm790, %v794, %v795
      %v797 = vrot.slane %v776, 1
      %v798 = vrot.slane %v503, 1
      %v799 = vsel %vm790, %v797, %v798
      %v800 = vrot.slane %v777, 1
      %v801 = vrot.slane %v504, 1
      %v802 = vsel %vm790, %v800, %v801
      %v803 = vrot.slane %v778, 1
      %v804 = vrot.slane %v505, 1
      %v805 = vsel %vm790, %v803, %v804
      %v806 = vrot.slane %v779, 1
      %v807 = vrot.slane %v506, 1
      %v808 = vsel %vm790, %v806, %v807
      %v809 = vrot.slane %v780, 1
      %v810 = vrot.slane %v507, 1
      %v811 = vsel %vm790, %v809, %v810
      %v812 = vrot.slane %v781, 1
      %v813 = vrot.slane %v508, 1
      %v814 = vsel %vm790, %v812, %v813
      %v815 = vrot.slane %v782, 1
      %v816 = vrot.slane %v509, 1
      %v817 = vsel %vm790, %v815, %v816
      %v818 = vrot.slane %v783, 1
      %v819 = vrot.slane %v510, 1
      %v820 = vsel %vm790, %v818, %v819
      %v821 = vrot.slane %v784, 1
      %v822 = vrot.slane %v511, 1
      %v823 = vsel %vm790, %v821, %v822
      %v824 = vrot.slane %v785, 1
      %v825 = vrot.slane %v512, 1
      %v826 = vsel %vm790, %v824, %v825
      %v827 = vrot.slane %v786, 1
      %v828 = vrot.slane %v513, 1
      %v829 = vsel %vm790, %v827, %v828
      %v830 = vrot.slane %v787, 1
      %v831 = vrot.slane %v514, 1
      %v832 = vsel %vm790, %v830, %v831
      %v833 = vrot.slane %v788, 1
      %v834 = vrot.slane %v515, 1
      %v835 = vsel %vm790, %v833, %v834
      %v836 = vrot.slane %v789, 1
      %v837 = vrot.slane %v516, 1
      %v838 = vsel %vm790, %v836, %v837
      %839 = vrot.lane.b32.xlu0 %v793, 8
      %v840 = vpop.permute.xlu0 %839
      %841 = vrot.lane.b32.xlu0 %v796, 8
      %v842 = vpop.permute.xlu0 %841
      %843 = vrot.lane.b32.xlu0 %v799, 8
      %v844 = vpop.permute.xlu0 %843
      %845 = vrot.lane.b32.xlu0 %v802, 8
      %v846 = vpop.permute.xlu0 %845
      %847 = vrot.lane.b32.xlu0 %v805, 8
      %v848 = vpop.permute.xlu0 %847
      %849 = vrot.lane.b32.xlu0 %v808, 8
      %v850 = vpop.permute.xlu0 %849
      %851 = vrot.lane.b32.xlu0 %v811, 8
      %v852 = vpop.permute.xlu0 %851
      %853 = vrot.lane.b32.xlu0 %v814, 8
      %v854 = vpop.permute.xlu0 %853
      %855 = vrot.lane.b32.xlu0 %v817, 8
      %v856 = vpop.permute.xlu0 %855
      %857 = vrot.lane.b32.xlu0 %v820, 8
      %v858 = vpop.permute.xlu0 %857
      %859 = vrot.lane.b32.xlu0 %v823, 8
      %v860 = vpop.permute.xlu0 %859
      %861 = vrot.lane.b32.xlu0 %v826, 8
      %v862 = vpop.permute.xlu0 %861
      %863 = vrot.lane.b32.xlu0 %v829, 8
      %v864 = vpop.permute.xlu0 %863
      %865 = vrot.lane.b32.xlu0 %v832, 8
      %v866 = vpop.permute.xlu0 %865
      %867 = vrot.lane.b32.xlu0 %v835, 8
      %v868 = vpop.permute.xlu0 %867
      %869 = vrot.lane.b32.xlu0 %v838, 8
      %v870 = vpop.permute.xlu0 %869
      %v903 = vunpack.c.l.b16 %v260
      %v904 = vunpack.c.l.b16 %v261
      %v905 = vunpack.c.l.b16 %v262
      %v906 = vunpack.c.l.b16 %v263
      %v907 = vunpack.c.l.b16 %v264
      %v908 = vunpack.c.l.b16 %v265
      %v909 = vunpack.c.l.b16 %v266
      %v910 = vunpack.c.l.b16 %v267
      %v911 = vunpack.c.l.b16 %v268
      %v912 = vunpack.c.l.b16 %v269
      %v913 = vunpack.c.l.b16 %v270
      %v914 = vunpack.c.l.b16 %v271
      %v915 = vunpack.c.l.b16 %v272
      %v916 = vunpack.c.l.b16 %v273
      %v917 = vunpack.c.l.b16 %v274
      %v918 = vunpack.c.l.b16 %v275
      %v919 = vunpack.c.l.b16 %v276
      %v920 = vunpack.c.l.b16 %v277
      %v921 = vunpack.c.l.b16 %v278
      %v922 = vunpack.c.l.b16 %v279
      %v923 = vunpack.c.l.b16 %v280
      %v924 = vunpack.c.l.b16 %v281
      %v925 = vunpack.c.l.b16 %v282
      %v926 = vunpack.c.l.b16 %v283
      %v927 = vunpack.c.l.b16 %v284
      %v928 = vunpack.c.l.b16 %v285
      %v929 = vunpack.c.l.b16 %v286
      %v930 = vunpack.c.l.b16 %v287
      %v931 = vunpack.c.l.b16 %v288
      %v932 = vunpack.c.l.b16 %v289
      %v933 = vunpack.c.l.b16 %v290
      %v934 = vunpack.c.l.b16 %v291
      %v935 = vpack.c.b16 %v904, %v903
      %v936 = vpack.c.b16 %v906, %v905
      %v937 = vpack.c.b16 %v908, %v907
      %v938 = vpack.c.b16 %v910, %v909
      %v939 = vpack.c.b16 %v912, %v911
      %v940 = vpack.c.b16 %v914, %v913
      %v941 = vpack.c.b16 %v916, %v915
      %v942 = vpack.c.b16 %v918, %v917
      %v943 = vpack.c.b16 %v920, %v919
      %v944 = vpack.c.b16 %v922, %v921
      %v945 = vpack.c.b16 %v924, %v923
      %v946 = vpack.c.b16 %v926, %v925
      %v947 = vpack.c.b16 %v928, %v927
      %v948 = vpack.c.b16 %v930, %v929
      %v949 = vpack.c.b16 %v932, %v931
      %v950 = vpack.c.b16 %v934, %v933
      %951 = vrot.lane.b32.xlu0 %v935, 12
      %v952 = vpop.permute.xlu0 %951
      %953 = vrot.lane.b32.xlu0 %v936, 12
      %v954 = vpop.permute.xlu0 %953
      %955 = vrot.lane.b32.xlu0 %v937, 12
      %v956 = vpop.permute.xlu0 %955
      %957 = vrot.lane.b32.xlu0 %v938, 12
      %v958 = vpop.permute.xlu0 %957
      %959 = vrot.lane.b32.xlu0 %v939, 12
      %v960 = vpop.permute.xlu0 %959
      %961 = vrot.lane.b32.xlu0 %v940, 12
      %v962 = vpop.permute.xlu0 %961
      %963 = vrot.lane.b32.xlu0 %v941, 12
      %v964 = vpop.permute.xlu0 %963
      %965 = vrot.lane.b32.xlu0 %v942, 12
      %v966 = vpop.permute.xlu0 %965
      %967 = vrot.lane.b32.xlu0 %v943, 12
      %v968 = vpop.permute.xlu0 %967
      %969 = vrot.lane.b32.xlu0 %v944, 12
      %v970 = vpop.permute.xlu0 %969
      %971 = vrot.lane.b32.xlu0 %v945, 12
      %v972 = vpop.permute.xlu0 %971
      %973 = vrot.lane.b32.xlu0 %v946, 12
      %v974 = vpop.permute.xlu0 %973
      %975 = vrot.lane.b32.xlu0 %v947, 12
      %v976 = vpop.permute.xlu0 %975
      %977 = vrot.lane.b32.xlu0 %v948, 12
      %v978 = vpop.permute.xlu0 %977
      %979 = vrot.lane.b32.xlu0 %v949, 12
      %v980 = vpop.permute.xlu0 %979
      %981 = vrot.lane.b32.xlu0 %v950, 12
      %v982 = vpop.permute.xlu0 %981
      %v999 = vunpack.c.l.b16 %v292
      %v1000 = vunpack.c.l.b16 %v293
      %v1001 = vunpack.c.l.b16 %v294
      %v1002 = vunpack.c.l.b16 %v295
      %v1003 = vunpack.c.l.b16 %v296
      %v1004 = vunpack.c.l.b16 %v297
      %v1005 = vunpack.c.l.b16 %v298
      %v1006 = vunpack.c.l.b16 %v299
      %v1007 = vunpack.c.l.b16 %v300
      %v1008 = vunpack.c.l.b16 %v301
      %v1009 = vunpack.c.l.b16 %v302
      %v1010 = vunpack.c.l.b16 %v303
      %v1011 = vunpack.c.l.b16 %v304
      %v1012 = vunpack.c.l.b16 %v305
      %v1013 = vunpack.c.l.b16 %v306
      %v1014 = vunpack.c.l.b16 %v307
      %v1015 = vpack.c.b16 %v999, %v999
      %v1016 = vpack.c.b16 %v1000, %v1000
      %v1017 = vpack.c.b16 %v1001, %v1001
      %v1018 = vpack.c.b16 %v1002, %v1002
      %v1019 = vpack.c.b16 %v1003, %v1003
      %v1020 = vpack.c.b16 %v1004, %v1004
      %v1021 = vpack.c.b16 %v1005, %v1005
      %v1022 = vpack.c.b16 %v1006, %v1006
      %v1023 = vpack.c.b16 %v1007, %v1007
      %v1024 = vpack.c.b16 %v1008, %v1008
      %v1025 = vpack.c.b16 %v1009, %v1009
      %v1026 = vpack.c.b16 %v1010, %v1010
      %v1027 = vpack.c.b16 %v1011, %v1011
      %v1028 = vpack.c.b16 %v1012, %v1012
      %v1029 = vpack.c.b16 %v1013, %v1013
      %v1030 = vpack.c.b16 %v1014, %v1014
      %v1032 = vshrl.u32 %v935, 16
      %v1034 = vshll.u32 %v935, 16
      %v1036 = vrot.slane %v1034, 1
      %v1037 = vor.u32 %v1032, %v1036
      %v1039 = vshll.u32 %v1015, 16
      %v1041 = vrot.slane %v1039, 1
      %v1042 = vsel %vm517, %v1037, %v1041
      %v1044 = vshrl.u32 %v936, 16
      %v1046 = vshll.u32 %v936, 16
      %v1048 = vrot.slane %v1046, 1
      %v1049 = vor.u32 %v1044, %v1048
      %v1051 = vshll.u32 %v1016, 16
      %v1053 = vrot.slane %v1051, 1
      %v1054 = vsel %vm517, %v1049, %v1053
      %v1056 = vshrl.u32 %v937, 16
      %v1058 = vshll.u32 %v937, 16
      %v1060 = vrot.slane %v1058, 1
      %v1061 = vor.u32 %v1056, %v1060
      %v1063 = vshll.u32 %v1017, 16
      %v1065 = vrot.slane %v1063, 1
      %v1066 = vsel %vm517, %v1061, %v1065
      %v1068 = vshrl.u32 %v938, 16
      %v1070 = vshll.u32 %v938, 16
      %v1072 = vrot.slane %v1070, 1
      %v1073 = vor.u32 %v1068, %v1072
      %v1075 = vshll.u32 %v1018, 16
      %v1077 = vrot.slane %v1075, 1
      %v1078 = vsel %vm517, %v1073, %v1077
      %v1080 = vshrl.u32 %v939, 16
      %v1082 = vshll.u32 %v939, 16
      %v1084 = vrot.slane %v1082, 1
      %v1085 = vor.u32 %v1080, %v1084
      %v1087 = vshll.u32 %v1019, 16
      %v1089 = vrot.slane %v1087, 1
      %v1090 = vsel %vm517, %v1085, %v1089
      %v1092 = vshrl.u32 %v940, 16
      %v1094 = vshll.u32 %v940, 16
      %v1096 = vrot.slane %v1094, 1
      %v1097 = vor.u32 %v1092, %v1096
      %v1099 = vshll.u32 %v1020, 16
      %v1101 = vrot.slane %v1099, 1
      %v1102 = vsel %vm517, %v1097, %v1101
      %v1104 = vshrl.u32 %v941, 16
      %v1106 = vshll.u32 %v941, 16
      %v1108 = vrot.slane %v1106, 1
      %v1109 = vor.u32 %v1104, %v1108
      %v1111 = vshll.u32 %v1021, 16
      %v1113 = vrot.slane %v1111, 1
      %v1114 = vsel %vm517, %v1109, %v1113
      %v1116 = vshrl.u32 %v942, 16
      %v1118 = vshll.u32 %v942, 16
      %v1120 = vrot.slane %v1118, 1
      %v1121 = vor.u32 %v1116, %v1120
      %v1123 = vshll.u32 %v1022, 16
      %v1125 = vrot.slane %v1123, 1
      %v1126 = vsel %vm517, %v1121, %v1125
      %v1128 = vshrl.u32 %v943, 16
      %v1130 = vshll.u32 %v943, 16
      %v1132 = vrot.slane %v1130, 1
      %v1133 = vor.u32 %v1128, %v1132
      %v1135 = vshll.u32 %v1023, 16
      %v1137 = vrot.slane %v1135, 1
      %v1138 = vsel %vm517, %v1133, %v1137
      %v1140 = vshrl.u32 %v944, 16
      %v1142 = vshll.u32 %v944, 16
      %v1144 = vrot.slane %v1142, 1
      %v1145 = vor.u32 %v1140, %v1144
      %v1147 = vshll.u32 %v1024, 16
      %v1149 = vrot.slane %v1147, 1
      %v1150 = vsel %vm517, %v1145, %v1149
      %v1152 = vshrl.u32 %v945, 16
      %v1154 = vshll.u32 %v945, 16
      %v1156 = vrot.slane %v1154, 1
      %v1157 = vor.u32 %v1152, %v1156
      %v1159 = vshll.u32 %v1025, 16
      %v1161 = vrot.slane %v1159, 1
      %v1162 = vsel %vm517, %v1157, %v1161
      %v1164 = vshrl.u32 %v946, 16
      %v1166 = vshll.u32 %v946, 16
      %v1168 = vrot.slane %v1166, 1
      %v1169 = vor.u32 %v1164, %v1168
      %v1171 = vshll.u32 %v1026, 16
      %v1173 = vrot.slane %v1171, 1
      %v1174 = vsel %vm517, %v1169, %v1173
      %v1176 = vshrl.u32 %v947, 16
      %v1178 = vshll.u32 %v947, 16
      %v1180 = vrot.slane %v1178, 1
      %v1181 = vor.u32 %v1176, %v1180
      %v1183 = vshll.u32 %v1027, 16
      %v1185 = vrot.slane %v1183, 1
      %v1186 = vsel %vm517, %v1181, %v1185
      %v1188 = vshrl.u32 %v948, 16
      %v1190 = vshll.u32 %v948, 16
      %v1192 = vrot.slane %v1190, 1
      %v1193 = vor.u32 %v1188, %v1192
      %v1195 = vshll.u32 %v1028, 16
      %v1197 = vrot.slane %v1195, 1
      %v1198 = vsel %vm517, %v1193, %v1197
      %v1200 = vshrl.u32 %v949, 16
      %v1202 = vshll.u32 %v949, 16
      %v1204 = vrot.slane %v1202, 1
      %v1205 = vor.u32 %v1200, %v1204
      %v1207 = vshll.u32 %v1029, 16
      %v1209 = vrot.slane %v1207, 1
      %v1210 = vsel %vm517, %v1205, %v1209
      %v1212 = vshrl.u32 %v950, 16
      %v1214 = vshll.u32 %v950, 16
      %v1216 = vrot.slane %v1214, 1
      %v1217 = vor.u32 %v1212, %v1216
      %v1219 = vshll.u32 %v1030, 16
      %v1221 = vrot.slane %v1219, 1
      %v1222 = vsel %vm517, %v1217, %v1221
      %1223 = vrot.lane.b32.xlu0 %v1042, 16
      %v1224 = vpop.permute.xlu0 %1223
      %1225 = vrot.lane.b32.xlu0 %v1054, 16
      %v1226 = vpop.permute.xlu0 %1225
      %1227 = vrot.lane.b32.xlu0 %v1066, 16
      %v1228 = vpop.permute.xlu0 %1227
      %1229 = vrot.lane.b32.xlu0 %v1078, 16
      %v1230 = vpop.permute.xlu0 %1229
      %1231 = vrot.lane.b32.xlu0 %v1090, 16
      %v1232 = vpop.permute.xlu0 %1231
      %1233 = vrot.lane.b32.xlu0 %v1102, 16
      %v1234 = vpop.permute.xlu0 %1233
      %1235 = vrot.lane.b32.xlu0 %v1114, 16
      %v1236 = vpop.permute.xlu0 %1235
      %1237 = vrot.lane.b32.xlu0 %v1126, 16
      %v1238 = vpop.permute.xlu0 %1237
      %1239 = vrot.lane.b32.xlu0 %v1138, 16
      %v1240 = vpop.permute.xlu0 %1239
      %1241 = vrot.lane.b32.xlu0 %v1150, 16
      %v1242 = vpop.permute.xlu0 %1241
      %1243 = vrot.lane.b32.xlu0 %v1162, 16
      %v1244 = vpop.permute.xlu0 %1243
      %1245 = vrot.lane.b32.xlu0 %v1174, 16
      %v1246 = vpop.permute.xlu0 %1245
      %1247 = vrot.lane.b32.xlu0 %v1186, 16
      %v1248 = vpop.permute.xlu0 %1247
      %1249 = vrot.lane.b32.xlu0 %v1198, 16
      %v1250 = vpop.permute.xlu0 %1249
      %1251 = vrot.lane.b32.xlu0 %v1210, 16
      %v1252 = vpop.permute.xlu0 %1251
      %1253 = vrot.lane.b32.xlu0 %v1222, 16
      %v1254 = vpop.permute.xlu0 %1253
      %v1271 = vunpack.c.l.b16 %v308
      %v1272 = vunpack.c.l.b16 %v309
      %v1273 = vunpack.c.l.b16 %v310
      %v1274 = vunpack.c.l.b16 %v311
      %v1275 = vunpack.c.l.b16 %v312
      %v1276 = vunpack.c.l.b16 %v313
      %v1277 = vunpack.c.l.b16 %v314
      %v1278 = vunpack.c.l.b16 %v315
      %v1279 = vunpack.c.l.b16 %v316
      %v1280 = vunpack.c.l.b16 %v317
      %v1281 = vunpack.c.l.b16 %v318
      %v1282 = vunpack.c.l.b16 %v319
      %v1283 = vunpack.c.l.b16 %v320
      %v1284 = vunpack.c.l.b16 %v321
      %v1285 = vunpack.c.l.b16 %v322
      %v1286 = vunpack.c.l.b16 %v323
      %v1287 = vpack.c.b16 %v904, %v1271
      %v1288 = vpack.c.b16 %v906, %v1272
      %v1289 = vpack.c.b16 %v908, %v1273
      %v1290 = vpack.c.b16 %v910, %v1274
      %v1291 = vpack.c.b16 %v912, %v1275
      %v1292 = vpack.c.b16 %v914, %v1276
      %v1293 = vpack.c.b16 %v916, %v1277
      %v1294 = vpack.c.b16 %v918, %v1278
      %v1295 = vpack.c.b16 %v920, %v1279
      %v1296 = vpack.c.b16 %v922, %v1280
      %v1297 = vpack.c.b16 %v924, %v1281
      %v1298 = vpack.c.b16 %v926, %v1282
      %v1299 = vpack.c.b16 %v928, %v1283
      %v1300 = vpack.c.b16 %v930, %v1284
      %v1301 = vpack.c.b16 %v932, %v1285
      %v1302 = vpack.c.b16 %v934, %v1286
      %v1303 = vrot.slane %v1287, 1
      %v1304 = vrot.slane %v1015, 1
      %v1305 = vsel %vm790, %v1303, %v1304
      %v1306 = vrot.slane %v1288, 1
      %v1307 = vrot.slane %v1016, 1
      %v1308 = vsel %vm790, %v1306, %v1307
      %v1309 = vrot.slane %v1289, 1
      %v1310 = vrot.slane %v1017, 1
      %v1311 = vsel %vm790, %v1309, %v1310
      %v1312 = vrot.slane %v1290, 1
      %v1313 = vrot.slane %v1018, 1
      %v1314 = vsel %vm790, %v1312, %v1313
      %v1315 = vrot.slane %v1291, 1
      %v1316 = vrot.slane %v1019, 1
      %v1317 = vsel %vm790, %v1315, %v1316
      %v1318 = vrot.slane %v1292, 1
      %v1319 = vrot.slane %v1020, 1
      %v1320 = vsel %vm790, %v1318, %v1319
      %v1321 = vrot.slane %v1293, 1
      %v1322 = vrot.slane %v1021, 1
      %v1323 = vsel %vm790, %v1321, %v1322
      %v1324 = vrot.slane %v1294, 1
      %v1325 = vrot.slane %v1022, 1
      %v1326 = vsel %vm790, %v1324, %v1325
      %v1327 = vrot.slane %v1295, 1
      %v1328 = vrot.slane %v1023, 1
      %v1329 = vsel %vm790, %v1327, %v1328
      %v1330 = vrot.slane %v1296, 1
      %v1331 = vrot.slane %v1024, 1
      %v1332 = vsel %vm790, %v1330, %v1331
      %v1333 = vrot.slane %v1297, 1
      %v1334 = vrot.slane %v1025, 1
      %v1335 = vsel %vm790, %v1333, %v1334
      %v1336 = vrot.slane %v1298, 1
      %v1337 = vrot.slane %v1026, 1
      %v1338 = vsel %vm790, %v1336, %v1337
      %v1339 = vrot.slane %v1299, 1
      %v1340 = vrot.slane %v1027, 1
      %v1341 = vsel %vm790, %v1339, %v1340
      %v1342 = vrot.slane %v1300, 1
      %v1343 = vrot.slane %v1028, 1
      %v1344 = vsel %vm790, %v1342, %v1343
      %v1345 = vrot.slane %v1301, 1
      %v1346 = vrot.slane %v1029, 1
      %v1347 = vsel %vm790, %v1345, %v1346
      %v1348 = vrot.slane %v1302, 1
      %v1349 = vrot.slane %v1030, 1
      %v1350 = vsel %vm790, %v1348, %v1349
      %1351 = vrot.lane.b32.xlu0 %v1305, 20
      %v1352 = vpop.permute.xlu0 %1351
      %1353 = vrot.lane.b32.xlu0 %v1308, 20
      %v1354 = vpop.permute.xlu0 %1353
      %1355 = vrot.lane.b32.xlu0 %v1311, 20
      %v1356 = vpop.permute.xlu0 %1355
      %1357 = vrot.lane.b32.xlu0 %v1314, 20
      %v1358 = vpop.permute.xlu0 %1357
      %1359 = vrot.lane.b32.xlu0 %v1317, 20
      %v1360 = vpop.permute.xlu0 %1359
      %1361 = vrot.lane.b32.xlu0 %v1320, 20
      %v1362 = vpop.permute.xlu0 %1361
      %1363 = vrot.lane.b32.xlu0 %v1323, 20
      %v1364 = vpop.permute.xlu0 %1363
      %1365 = vrot.lane.b32.xlu0 %v1326, 20
      %v1366 = vpop.permute.xlu0 %1365
      %1367 = vrot.lane.b32.xlu0 %v1329, 20
      %v1368 = vpop.permute.xlu0 %1367
      %1369 = vrot.lane.b32.xlu0 %v1332, 20
      %v1370 = vpop.permute.xlu0 %1369
      %1371 = vrot.lane.b32.xlu0 %v1335, 20
      %v1372 = vpop.permute.xlu0 %1371
      %1373 = vrot.lane.b32.xlu0 %v1338, 20
      %v1374 = vpop.permute.xlu0 %1373
      %1375 = vrot.lane.b32.xlu0 %v1341, 20
      %v1376 = vpop.permute.xlu0 %1375
      %1377 = vrot.lane.b32.xlu0 %v1344, 20
      %v1378 = vpop.permute.xlu0 %1377
      %1379 = vrot.lane.b32.xlu0 %v1347, 20
      %v1380 = vpop.permute.xlu0 %1379
      %1381 = vrot.lane.b32.xlu0 %v1350, 20
      %v1382 = vpop.permute.xlu0 %1381
      %v1415 = vunpack.c.l.b16 %v325
      %v1416 = vunpack.c.l.b16 %v326
      %v1417 = vunpack.c.l.b16 %v327
      %v1418 = vunpack.c.l.b16 %v328
      %v1419 = vunpack.c.l.b16 %v329
      %v1420 = vunpack.c.l.b16 %v330
      %v1421 = vunpack.c.l.b16 %v331
      %v1422 = vunpack.c.l.b16 %v332
      %v1423 = vunpack.c.l.b16 %v333
      %v1424 = vunpack.c.l.b16 %v334
      %v1425 = vunpack.c.l.b16 %v335
      %v1426 = vunpack.c.l.b16 %v336
      %v1427 = vunpack.c.l.b16 %v337
      %v1428 = vunpack.c.l.b16 %v338
      %v1429 = vunpack.c.l.b16 %v339
      %v1430 = vunpack.c.l.b16 %v340
      %v1431 = vunpack.c.l.b16 %v341
      %v1432 = vunpack.c.l.b16 %v342
      %v1433 = vunpack.c.l.b16 %v343
      %v1434 = vunpack.c.l.b16 %v344
      %v1435 = vunpack.c.l.b16 %v345
      %v1436 = vunpack.c.l.b16 %v346
      %v1437 = vunpack.c.l.b16 %v347
      %v1438 = vunpack.c.l.b16 %v348
      %v1439 = vunpack.c.l.b16 %v349
      %v1440 = vunpack.c.l.b16 %v350
      %v1441 = vunpack.c.l.b16 %v351
      %v1442 = vunpack.c.l.b16 %v352
      %v1443 = vunpack.c.l.b16 %v353
      %v1444 = vunpack.c.l.b16 %v354
      %v1445 = vunpack.c.l.b16 %v355
      %v1446 = vunpack.c.l.b16 %v356
      %v1447 = vpack.c.b16 %v1416, %v1415
      %v1448 = vpack.c.b16 %v1418, %v1417
      %v1449 = vpack.c.b16 %v1420, %v1419
      %v1450 = vpack.c.b16 %v1422, %v1421
      %v1451 = vpack.c.b16 %v1424, %v1423
      %v1452 = vpack.c.b16 %v1426, %v1425
      %v1453 = vpack.c.b16 %v1428, %v1427
      %v1454 = vpack.c.b16 %v1430, %v1429
      %v1455 = vpack.c.b16 %v1432, %v1431
      %v1456 = vpack.c.b16 %v1434, %v1433
      %v1457 = vpack.c.b16 %v1436, %v1435
      %v1458 = vpack.c.b16 %v1438, %v1437
      %v1459 = vpack.c.b16 %v1440, %v1439
      %v1460 = vpack.c.b16 %v1442, %v1441
      %v1461 = vpack.c.b16 %v1444, %v1443
      %v1462 = vpack.c.b16 %v1446, %v1445
      %1463 = vrot.lane.b32.xlu0 %v1447, 24
      %v1464 = vpop.permute.xlu0 %1463
      %1465 = vrot.lane.b32.xlu0 %v1448, 24
      %v1466 = vpop.permute.xlu0 %1465
      %1467 = vrot.lane.b32.xlu0 %v1449, 24
      %v1468 = vpop.permute.xlu0 %1467
      %1469 = vrot.lane.b32.xlu0 %v1450, 24
      %v1470 = vpop.permute.xlu0 %1469
      %1471 = vrot.lane.b32.xlu0 %v1451, 24
      %v1472 = vpop.permute.xlu0 %1471
      %1473 = vrot.lane.b32.xlu0 %v1452, 24
      %v1474 = vpop.permute.xlu0 %1473
      %1475 = vrot.lane.b32.xlu0 %v1453, 24
      %v1476 = vpop.permute.xlu0 %1475
      %1477 = vrot.lane.b32.xlu0 %v1454, 24
      %v1478 = vpop.permute.xlu0 %1477
      %1479 = vrot.lane.b32.xlu0 %v1455, 24
      %v1480 = vpop.permute.xlu0 %1479
      %1481 = vrot.lane.b32.xlu0 %v1456, 24
      %v1482 = vpop.permute.xlu0 %1481
      %1483 = vrot.lane.b32.xlu0 %v1457, 24
      %v1484 = vpop.permute.xlu0 %1483
      %1485 = vrot.lane.b32.xlu0 %v1458, 24
      %v1486 = vpop.permute.xlu0 %1485
      %1487 = vrot.lane.b32.xlu0 %v1459, 24
      %v1488 = vpop.permute.xlu0 %1487
      %1489 = vrot.lane.b32.xlu0 %v1460, 24
      %v1490 = vpop.permute.xlu0 %1489
      %1491 = vrot.lane.b32.xlu0 %v1461, 24
      %v1492 = vpop.permute.xlu0 %1491
      %1493 = vrot.lane.b32.xlu0 %v1462, 24
      %v1494 = vpop.permute.xlu0 %1493
      %v1511 = vunpack.c.l.b16 %v357
      %v1512 = vunpack.c.l.b16 %v358
      %v1513 = vunpack.c.l.b16 %v359
      %v1514 = vunpack.c.l.b16 %v360
      %v1515 = vunpack.c.l.b16 %v361
      %v1516 = vunpack.c.l.b16 %v362
      %v1517 = vunpack.c.l.b16 %v363
      %v1518 = vunpack.c.l.b16 %v364
      %v1519 = vunpack.c.l.b16 %v365
      %v1520 = vunpack.c.l.b16 %v366
      %v1521 = vunpack.c.l.b16 %v367
      %v1522 = vunpack.c.l.b16 %v368
      %v1523 = vunpack.c.l.b16 %v369
      %v1524 = vunpack.c.l.b16 %v370
      %v1525 = vunpack.c.l.b16 %v371
      %v1526 = vunpack.c.l.b16 %v372
      %v1527 = vpack.c.b16 %v1511, %v1511
      %v1528 = vpack.c.b16 %v1512, %v1512
      %v1529 = vpack.c.b16 %v1513, %v1513
      %v1530 = vpack.c.b16 %v1514, %v1514
      %v1531 = vpack.c.b16 %v1515, %v1515
      %v1532 = vpack.c.b16 %v1516, %v1516
      %v1533 = vpack.c.b16 %v1517, %v1517
      %v1534 = vpack.c.b16 %v1518, %v1518
      %v1535 = vpack.c.b16 %v1519, %v1519
      %v1536 = vpack.c.b16 %v1520, %v1520
      %v1537 = vpack.c.b16 %v1521, %v1521
      %v1538 = vpack.c.b16 %v1522, %v1522
      %v1539 = vpack.c.b16 %v1523, %v1523
      %v1540 = vpack.c.b16 %v1524, %v1524
      %v1541 = vpack.c.b16 %v1525, %v1525
      %v1542 = vpack.c.b16 %v1526, %v1526
      %v1544 = vshrl.u32 %v1447, 16
      %v1546 = vshll.u32 %v1447, 16
      %v1548 = vrot.slane %v1546, 1
      %v1549 = vor.u32 %v1544, %v1548
      %v1551 = vshll.u32 %v1527, 16
      %v1553 = vrot.slane %v1551, 1
      %v1554 = vsel %vm517, %v1549, %v1553
      %v1556 = vshrl.u32 %v1448, 16
      %v1558 = vshll.u32 %v1448, 16
      %v1560 = vrot.slane %v1558, 1
      %v1561 = vor.u32 %v1556, %v1560
      %v1563 = vshll.u32 %v1528, 16
      %v1565 = vrot.slane %v1563, 1
      %v1566 = vsel %vm517, %v1561, %v1565
      %v1568 = vshrl.u32 %v1449, 16
      %v1570 = vshll.u32 %v1449, 16
      %v1572 = vrot.slane %v1570, 1
      %v1573 = vor.u32 %v1568, %v1572
      %v1575 = vshll.u32 %v1529, 16
      %v1577 = vrot.slane %v1575, 1
      %v1578 = vsel %vm517, %v1573, %v1577
      %v1580 = vshrl.u32 %v1450, 16
      %v1582 = vshll.u32 %v1450, 16
      %v1584 = vrot.slane %v1582, 1
      %v1585 = vor.u32 %v1580, %v1584
      %v1587 = vshll.u32 %v1530, 16
      %v1589 = vrot.slane %v1587, 1
      %v1590 = vsel %vm517, %v1585, %v1589
      %v1592 = vshrl.u32 %v1451, 16
      %v1594 = vshll.u32 %v1451, 16
      %v1596 = vrot.slane %v1594, 1
      %v1597 = vor.u32 %v1592, %v1596
      %v1599 = vshll.u32 %v1531, 16
      %v1601 = vrot.slane %v1599, 1
      %v1602 = vsel %vm517, %v1597, %v1601
      %v1604 = vshrl.u32 %v1452, 16
      %v1606 = vshll.u32 %v1452, 16
      %v1608 = vrot.slane %v1606, 1
      %v1609 = vor.u32 %v1604, %v1608
      %v1611 = vshll.u32 %v1532, 16
      %v1613 = vrot.slane %v1611, 1
      %v1614 = vsel %vm517, %v1609, %v1613
      %v1616 = vshrl.u32 %v1453, 16
      %v1618 = vshll.u32 %v1453, 16
      %v1620 = vrot.slane %v1618, 1
      %v1621 = vor.u32 %v1616, %v1620
      %v1623 = vshll.u32 %v1533, 16
      %v1625 = vrot.slane %v1623, 1
      %v1626 = vsel %vm517, %v1621, %v1625
      %v1628 = vshrl.u32 %v1454, 16
      %v1630 = vshll.u32 %v1454, 16
      %v1632 = vrot.slane %v1630, 1
      %v1633 = vor.u32 %v1628, %v1632
      %v1635 = vshll.u32 %v1534, 16
      %v1637 = vrot.slane %v1635, 1
      %v1638 = vsel %vm517, %v1633, %v1637
      %v1640 = vshrl.u32 %v1455, 16
      %v1642 = vshll.u32 %v1455, 16
      %v1644 = vrot.slane %v1642, 1
      %v1645 = vor.u32 %v1640, %v1644
      %v1647 = vshll.u32 %v1535, 16
      %v1649 = vrot.slane %v1647, 1
      %v1650 = vsel %vm517, %v1645, %v1649
      %v1652 = vshrl.u32 %v1456, 16
      %v1654 = vshll.u32 %v1456, 16
      %v1656 = vrot.slane %v1654, 1
      %v1657 = vor.u32 %v1652, %v1656
      %v1659 = vshll.u32 %v1536, 16
      %v1661 = vrot.slane %v1659, 1
      %v1662 = vsel %vm517, %v1657, %v1661
      %v1664 = vshrl.u32 %v1457, 16
      %v1666 = vshll.u32 %v1457, 16
      %v1668 = vrot.slane %v1666, 1
      %v1669 = vor.u32 %v1664, %v1668
      %v1671 = vshll.u32 %v1537, 16
      %v1673 = vrot.slane %v1671, 1
      %v1674 = vsel %vm517, %v1669, %v1673
      %v1676 = vshrl.u32 %v1458, 16
      %v1678 = vshll.u32 %v1458, 16
      %v1680 = vrot.slane %v1678, 1
      %v1681 = vor.u32 %v1676, %v1680
      %v1683 = vshll.u32 %v1538, 16
      %v1685 = vrot.slane %v1683, 1
      %v1686 = vsel %vm517, %v1681, %v1685
      %v1688 = vshrl.u32 %v1459, 16
      %v1690 = vshll.u32 %v1459, 16
      %v1692 = vrot.slane %v1690, 1
      %v1693 = vor.u32 %v1688, %v1692
      %v1695 = vshll.u32 %v1539, 16
      %v1697 = vrot.slane %v1695, 1
      %v1698 = vsel %vm517, %v1693, %v1697
      %v1700 = vshrl.u32 %v1460, 16
      %v1702 = vshll.u32 %v1460, 16
      %v1704 = vrot.slane %v1702, 1
      %v1705 = vor.u32 %v1700, %v1704
      %v1707 = vshll.u32 %v1540, 16
      %v1709 = vrot.slane %v1707, 1
      %v1710 = vsel %vm517, %v1705, %v1709
      %v1712 = vshrl.u32 %v1461, 16
      %v1714 = vshll.u32 %v1461, 16
      %v1716 = vrot.slane %v1714, 1
      %v1717 = vor.u32 %v1712, %v1716
      %v1719 = vshll.u32 %v1541, 16
      %v1721 = vrot.slane %v1719, 1
      %v1722 = vsel %vm517, %v1717, %v1721
      %v1724 = vshrl.u32 %v1462, 16
      %v1726 = vshll.u32 %v1462, 16
      %v1728 = vrot.slane %v1726, 1
      %v1729 = vor.u32 %v1724, %v1728
      %v1731 = vshll.u32 %v1542, 16
      %v1733 = vrot.slane %v1731, 1
      %v1734 = vsel %vm517, %v1729, %v1733
      %1735 = vrot.lane.b32.xlu0 %v1554, 28
      %v1736 = vpop.permute.xlu0 %1735
      %1737 = vrot.lane.b32.xlu0 %v1566, 28
      %v1738 = vpop.permute.xlu0 %1737
      %1739 = vrot.lane.b32.xlu0 %v1578, 28
      %v1740 = vpop.permute.xlu0 %1739
      %1741 = vrot.lane.b32.xlu0 %v1590, 28
      %v1742 = vpop.permute.xlu0 %1741
      %1743 = vrot.lane.b32.xlu0 %v1602, 28
      %v1744 = vpop.permute.xlu0 %1743
      %1745 = vrot.lane.b32.xlu0 %v1614, 28
      %v1746 = vpop.permute.xlu0 %1745
      %1747 = vrot.lane.b32.xlu0 %v1626, 28
      %v1748 = vpop.permute.xlu0 %1747
      %1749 = vrot.lane.b32.xlu0 %v1638, 28
      %v1750 = vpop.permute.xlu0 %1749
      %1751 = vrot.lane.b32.xlu0 %v1650, 28
      %v1752 = vpop.permute.xlu0 %1751
      %1753 = vrot.lane.b32.xlu0 %v1662, 28
      %v1754 = vpop.permute.xlu0 %1753
      %1755 = vrot.lane.b32.xlu0 %v1674, 28
      %v1756 = vpop.permute.xlu0 %1755
      %1757 = vrot.lane.b32.xlu0 %v1686, 28
      %v1758 = vpop.permute.xlu0 %1757
      %1759 = vrot.lane.b32.xlu0 %v1698, 28
      %v1760 = vpop.permute.xlu0 %1759
      %1761 = vrot.lane.b32.xlu0 %v1710, 28
      %v1762 = vpop.permute.xlu0 %1761
      %1763 = vrot.lane.b32.xlu0 %v1722, 28
      %v1764 = vpop.permute.xlu0 %1763
      %1765 = vrot.lane.b32.xlu0 %v1734, 28
      %v1766 = vpop.permute.xlu0 %1765
      %v1783 = vunpack.c.l.b16 %v373
      %v1784 = vunpack.c.l.b16 %v374
      %v1785 = vunpack.c.l.b16 %v375
      %v1786 = vunpack.c.l.b16 %v376
      %v1787 = vunpack.c.l.b16 %v377
      %v1788 = vunpack.c.l.b16 %v378
      %v1789 = vunpack.c.l.b16 %v379
      %v1790 = vunpack.c.l.b16 %v380
      %v1791 = vunpack.c.l.b16 %v381
      %v1792 = vunpack.c.l.b16 %v382
      %v1793 = vunpack.c.l.b16 %v383
      %v1794 = vunpack.c.l.b16 %v384
      %v1795 = vunpack.c.l.b16 %v385
      %v1796 = vunpack.c.l.b16 %v386
      %v1797 = vunpack.c.l.b16 %v387
      %v1798 = vunpack.c.l.b16 %v388
      %v1799 = vpack.c.b16 %v1416, %v1783
      %v1800 = vpack.c.b16 %v1418, %v1784
      %v1801 = vpack.c.b16 %v1420, %v1785
      %v1802 = vpack.c.b16 %v1422, %v1786
      %v1803 = vpack.c.b16 %v1424, %v1787
      %v1804 = vpack.c.b16 %v1426, %v1788
      %v1805 = vpack.c.b16 %v1428, %v1789
      %v1806 = vpack.c.b16 %v1430, %v1790
      %v1807 = vpack.c.b16 %v1432, %v1791
      %v1808 = vpack.c.b16 %v1434, %v1792
      %v1809 = vpack.c.b16 %v1436, %v1793
      %v1810 = vpack.c.b16 %v1438, %v1794
      %v1811 = vpack.c.b16 %v1440, %v1795
      %v1812 = vpack.c.b16 %v1442, %v1796
      %v1813 = vpack.c.b16 %v1444, %v1797
      %v1814 = vpack.c.b16 %v1446, %v1798
      %v1815 = vrot.slane %v1799, 1
      %v1816 = vrot.slane %v1527, 1
      %v1817 = vsel %vm790, %v1815, %v1816
      %v1818 = vrot.slane %v1800, 1
      %v1819 = vrot.slane %v1528, 1
      %v1820 = vsel %vm790, %v1818, %v1819
      %v1821 = vrot.slane %v1801, 1
      %v1822 = vrot.slane %v1529, 1
      %v1823 = vsel %vm790, %v1821, %v1822
      %v1824 = vrot.slane %v1802, 1
      %v1825 = vrot.slane %v1530, 1
      %v1826 = vsel %vm790, %v1824, %v1825
      %v1827 = vrot.slane %v1803, 1
      %v1828 = vrot.slane %v1531, 1
      %v1829 = vsel %vm790, %v1827, %v1828
      %v1830 = vrot.slane %v1804, 1
      %v1831 = vrot.slane %v1532, 1
      %v1832 = vsel %vm790, %v1830, %v1831
      %v1833 = vrot.slane %v1805, 1
      %v1834 = vrot.slane %v1533, 1
      %v1835 = vsel %vm790, %v1833, %v1834
      %v1836 = vrot.slane %v1806, 1
      %v1837 = vrot.slane %v1534, 1
      %v1838 = vsel %vm790, %v1836, %v1837
      %v1839 = vrot.slane %v1807, 1
      %v1840 = vrot.slane %v1535, 1
      %v1841 = vsel %vm790, %v1839, %v1840
      %v1842 = vrot.slane %v1808, 1
      %v1843 = vrot.slane %v1536, 1
      %v1844 = vsel %vm790, %v1842, %v1843
      %v1845 = vrot.slane %v1809, 1
      %v1846 = vrot.slane %v1537, 1
      %v1847 = vsel %vm790, %v1845, %v1846
      %v1848 = vrot.slane %v1810, 1
      %v1849 = vrot.slane %v1538, 1
      %v1850 = vsel %vm790, %v1848, %v1849
      %v1851 = vrot.slane %v1811, 1
      %v1852 = vrot.slane %v1539, 1
      %v1853 = vsel %vm790, %v1851, %v1852
      %v1854 = vrot.slane %v1812, 1
      %v1855 = vrot.slane %v1540, 1
      %v1856 = vsel %vm790, %v1854, %v1855
      %v1857 = vrot.slane %v1813, 1
      %v1858 = vrot.slane %v1541, 1
      %v1859 = vsel %vm790, %v1857, %v1858
      %v1860 = vrot.slane %v1814, 1
      %v1861 = vrot.slane %v1542, 1
      %v1862 = vsel %vm790, %v1860, %v1861
      %1863 = vrot.lane.b32.xlu0 %v1817, 32
      %v1864 = vpop.permute.xlu0 %1863
      %1865 = vrot.lane.b32.xlu0 %v1820, 32
      %v1866 = vpop.permute.xlu0 %1865
      %1867 = vrot.lane.b32.xlu0 %v1823, 32
      %v1868 = vpop.permute.xlu0 %1867
      %1869 = vrot.lane.b32.xlu0 %v1826, 32
      %v1870 = vpop.permute.xlu0 %1869
      %1871 = vrot.lane.b32.xlu0 %v1829, 32
      %v1872 = vpop.permute.xlu0 %1871
      %1873 = vrot.lane.b32.xlu0 %v1832, 32
      %v1874 = vpop.permute.xlu0 %1873
      %1875 = vrot.lane.b32.xlu0 %v1835, 32
      %v1876 = vpop.permute.xlu0 %1875
      %1877 = vrot.lane.b32.xlu0 %v1838, 32
      %v1878 = vpop.permute.xlu0 %1877
      %1879 = vrot.lane.b32.xlu0 %v1841, 32
      %v1880 = vpop.permute.xlu0 %1879
      %1881 = vrot.lane.b32.xlu0 %v1844, 32
      %v1882 = vpop.permute.xlu0 %1881
      %1883 = vrot.lane.b32.xlu0 %v1847, 32
      %v1884 = vpop.permute.xlu0 %1883
      %1885 = vrot.lane.b32.xlu0 %v1850, 32
      %v1886 = vpop.permute.xlu0 %1885
      %1887 = vrot.lane.b32.xlu0 %v1853, 32
      %v1888 = vpop.permute.xlu0 %1887
      %1889 = vrot.lane.b32.xlu0 %v1856, 32
      %v1890 = vpop.permute.xlu0 %1889
      %1891 = vrot.lane.b32.xlu0 %v1859, 32
      %v1892 = vpop.permute.xlu0 %1891
      %1893 = vrot.lane.b32.xlu0 %v1862, 32
      %v1894 = vpop.permute.xlu0 %1893
      %vm1895 = vcmask 31744
      %v1897 = vsel %vm1895, %v453, %v711
      %v1899 = vsel %vm1895, %v454, %v713
      %v1901 = vsel %vm1895, %v455, %v715
      %v1903 = vsel %vm1895, %v456, %v717
      %v1905 = vsel %vm1895, %v457, %v719
      %v1907 = vsel %vm1895, %v458, %v721
      %v1909 = vsel %vm1895, %v459, %v723
      %v1911 = vsel %vm1895, %v460, %v725
      %v1913 = vsel %vm1895, %v461, %v727
      %v1915 = vsel %vm1895, %v462, %v729
      %v1917 = vsel %vm1895, %v463, %v731
      %v1919 = vsel %vm1895, %v464, %v733
      %v1921 = vsel %vm1895, %v465, %v735
      %v1923 = vsel %vm1895, %v466, %v737
      %v1925 = vsel %vm1895, %v467, %v739
      %v1927 = vsel %vm1895, %v468, %v741
      %vm1928 = vcmask 64512
      %v1930 = vsel %vm1928, %v1897, %v840
      %v1932 = vsel %vm1928, %v1899, %v842
      %v1934 = vsel %vm1928, %v1901, %v844
      %v1936 = vsel %vm1928, %v1903, %v846
      %v1938 = vsel %vm1928, %v1905, %v848
      %v1940 = vsel %vm1928, %v1907, %v850
      %v1942 = vsel %vm1928, %v1909, %v852
      %v1944 = vsel %vm1928, %v1911, %v854
      %v1946 = vsel %vm1928, %v1913, %v856
      %v1948 = vsel %vm1928, %v1915, %v858
      %v1950 = vsel %vm1928, %v1917, %v860
      %v1952 = vsel %vm1928, %v1919, %v862
      %v1954 = vsel %vm1928, %v1921, %v864
      %v1956 = vsel %vm1928, %v1923, %v866
      %v1958 = vsel %vm1928, %v1925, %v868
      %v1960 = vsel %vm1928, %v1927, %v870
      %vm1961 = vcmask 97280
      %v1963 = vsel %vm1961, %v1930, %v952
      %v1965 = vsel %vm1961, %v1932, %v954
      %v1967 = vsel %vm1961, %v1934, %v956
      %v1969 = vsel %vm1961, %v1936, %v958
      %v1971 = vsel %vm1961, %v1938, %v960
      %v1973 = vsel %vm1961, %v1940, %v962
      %v1975 = vsel %vm1961, %v1942, %v964
      %v1977 = vsel %vm1961, %v1944, %v966
      %v1979 = vsel %vm1961, %v1946, %v968
      %v1981 = vsel %vm1961, %v1948, %v970
      %v1983 = vsel %vm1961, %v1950, %v972
      %v1985 = vsel %vm1961, %v1952, %v974
      %v1987 = vsel %vm1961, %v1954, %v976
      %v1989 = vsel %vm1961, %v1956, %v978
      %v1991 = vsel %vm1961, %v1958, %v980
      %v1993 = vsel %vm1961, %v1960, %v982
      %vm1994 = vcmask 130048
      %v1996 = vsel %vm1994, %v1963, %v1224
      %v1998 = vsel %vm1994, %v1965, %v1226
      %v2000 = vsel %vm1994, %v1967, %v1228
      %v2002 = vsel %vm1994, %v1969, %v1230
      %v2004 = vsel %vm1994, %v1971, %v1232
      %v2006 = vsel %vm1994, %v1973, %v1234
      %v2008 = vsel %vm1994, %v1975, %v1236
      %v2010 = vsel %vm1994, %v1977, %v1238
      %v2012 = vsel %vm1994, %v1979, %v1240
      %v2014 = vsel %vm1994, %v1981, %v1242
      %v2016 = vsel %vm1994, %v1983, %v1244
      %v2018 = vsel %vm1994, %v1985, %v1246
      %v2020 = vsel %vm1994, %v1987, %v1248
      %v2022 = vsel %vm1994, %v1989, %v1250
      %v2024 = vsel %vm1994, %v1991, %v1252
      %v2026 = vsel %vm1994, %v1993, %v1254
      %vm2027 = vcmask 162816
      %v2029 = vsel %vm2027, %v1996, %v1352
      %v2031 = vsel %vm2027, %v1998, %v1354
      %v2033 = vsel %vm2027, %v2000, %v1356
      %v2035 = vsel %vm2027, %v2002, %v1358
      %v2037 = vsel %vm2027, %v2004, %v1360
      %v2039 = vsel %vm2027, %v2006, %v1362
      %v2041 = vsel %vm2027, %v2008, %v1364
      %v2043 = vsel %vm2027, %v2010, %v1366
      %v2045 = vsel %vm2027, %v2012, %v1368
      %v2047 = vsel %vm2027, %v2014, %v1370
      %v2049 = vsel %vm2027, %v2016, %v1372
      %v2051 = vsel %vm2027, %v2018, %v1374
      %v2053 = vsel %vm2027, %v2020, %v1376
      %v2055 = vsel %vm2027, %v2022, %v1378
      %v2057 = vsel %vm2027, %v2024, %v1380
      %v2059 = vsel %vm2027, %v2026, %v1382
      %vm2060 = vcmask 195584
      %v2062 = vsel %vm2060, %v2029, %v1464
      %v2064 = vsel %vm2060, %v2031, %v1466
      %v2066 = vsel %vm2060, %v2033, %v1468
      %v2068 = vsel %vm2060, %v2035, %v1470
      %v2070 = vsel %vm2060, %v2037, %v1472
      %v2072 = vsel %vm2060, %v2039, %v1474
      %v2074 = vsel %vm2060, %v2041, %v1476
      %v2076 = vsel %vm2060, %v2043, %v1478
      %v2078 = vsel %vm2060, %v2045, %v1480
      %v2080 = vsel %vm2060, %v2047, %v1482
      %v2082 = vsel %vm2060, %v2049, %v1484
      %v2084 = vsel %vm2060, %v2051, %v1486
      %v2086 = vsel %vm2060, %v2053, %v1488
      %v2088 = vsel %vm2060, %v2055, %v1490
      %v2090 = vsel %vm2060, %v2057, %v1492
      %v2092 = vsel %vm2060, %v2059, %v1494
      %vm2093 = vcmask 228352
      %v2095 = vsel %vm2093, %v2062, %v1736
      %v2097 = vsel %vm2093, %v2064, %v1738
      %v2099 = vsel %vm2093, %v2066, %v1740
      %v2101 = vsel %vm2093, %v2068, %v1742
      %v2103 = vsel %vm2093, %v2070, %v1744
      %v2105 = vsel %vm2093, %v2072, %v1746
      %v2107 = vsel %vm2093, %v2074, %v1748
      %v2109 = vsel %vm2093, %v2076, %v1750
      %v2111 = vsel %vm2093, %v2078, %v1752
      %v2113 = vsel %vm2093, %v2080, %v1754
      %v2115 = vsel %vm2093, %v2082, %v1756
      %v2117 = vsel %vm2093, %v2084, %v1758
      %v2119 = vsel %vm2093, %v2086, %v1760
      %v2121 = vsel %vm2093, %v2088, %v1762
      %v2123 = vsel %vm2093, %v2090, %v1764
      %v2125 = vsel %vm2093, %v2092, %v1766
      %vm2126 = vcmask 261120
      %v2128 = vsel %vm2126, %v2095, %v1864
      %v2130 = vsel %vm2126, %v2097, %v1866
      %v2132 = vsel %vm2126, %v2099, %v1868
      %v2134 = vsel %vm2126, %v2101, %v1870
      %v2136 = vsel %vm2126, %v2103, %v1872
      %v2138 = vsel %vm2126, %v2105, %v1874
      %v2140 = vsel %vm2126, %v2107, %v1876
      %v2142 = vsel %vm2126, %v2109, %v1878
      %v2144 = vsel %vm2126, %v2111, %v1880
      %v2146 = vsel %vm2126, %v2113, %v1882
      %v2148 = vsel %vm2126, %v2115, %v1884
      %v2150 = vsel %vm2126, %v2117, %v1886
      %v2152 = vsel %vm2126, %v2119, %v1888
      %v2154 = vsel %vm2126, %v2121, %v1890
      %v2156 = vsel %vm2126, %v2123, %v1892
      %v2158 = vsel %vm2126, %v2125, %v1894
      %v2159 = vld [vmem:[%s1] sm:$0xf]
      %v2160 = vld [vmem:[%s1 + $0x4] sm:$0xf]
      %v2161 = vld [vmem:[%s1 + $0x8] sm:$0xf]
      %v2162 = vld [vmem:[%s1 + $0xc] sm:$0xf]
      %v2163 = vld [vmem:[%s1 + $0x10] sm:$0x3]
      %v2164 = vld [vmem:[%s2] sm:$0x1]
      %v2166 = vlaneseq
      %v2167 = vshrl.u32 %v2166, 7
      %v2168 = vsub.s32 0, %v2167
      %v2169 = vrot.slane %v2164, %v2168
      %v2176 = vunpack.c.l.b16 %v2159
      %v2177 = vunpack.c.l.b16 %v2160
      %v2178 = vunpack.c.l.b16 %v2161
      %v2179 = vunpack.c.l.b16 %v2162
      %v2180 = vunpack.c.l.b16 %v2163
      %v2181 = vpack.c.b16 %v2177, %v2176
      %v2182 = vpack.c.b16 %v2179, %v2178
      %v2183 = vpack.c.b16 %v2180, %v2180
      %vm2186 = vcmask 293888
      %v2187 = vsel %vm2186, %v2128, 0
      %v2189 = vsel %vm2186, %v2130, 0
      %v2191 = vsel %vm2186, %v2132, 0
      %v2193 = vsel %vm2186, %v2134, 0
      %v2195 = vsel %vm2186, %v2136, 0
      %v2197 = vsel %vm2186, %v2138, 0
      %v2199 = vsel %vm2186, %v2140, 0
      %v2201 = vsel %vm2186, %v2142, 0
      %v2203 = vsel %vm2186, %v2144, 0
      %v2205 = vsel %vm2186, %v2146, 0
      %v2207 = vsel %vm2186, %v2148, 0
      %v2209 = vsel %vm2186, %v2150, 0
      %v2211 = vsel %vm2186, %v2152, 0
      %v2213 = vsel %vm2186, %v2154, 0
      %v2215 = vsel %vm2186, %v2156, 0
      %v2217 = vsel %vm2186, %v2158, 0
      %vm2219 = vcmask 1041408
      %v2221 = vsel %vm2219, %v2183, 0
      %2223 = vmatprep.subr.bf16.mxu0 0
      %2224 = vmatpush1.bf16.msra.mxu0 %v2181
      %2225 = vmatprep.subr.bf16.mxu0 0
      %2226 = vmatpush1.bf16.msra.mxu0 %v2182
      %2227 = vmatprep.subr.bf16.mxu0 0
      %2228 = vmatpush1.bf16.msra.mxu0 %v2221
      %2229 = vmatprep.subr.bf16.mxu0 0
      %2230 = vmatpush1.bf16.msra.mxu0 0
      %2231 = vmatprep.subr.bf16.mxu0 0
      %2232 = vmatpush1.bf16.msra.mxu0 0
      %2233 = vmatprep.subr.bf16.mxu0 0
      %2234 = vmatpush1.bf16.msra.mxu0 0
      %2235 = vmatprep.subr.bf16.mxu0 0
      %2236 = vmatpush1.bf16.msra.mxu0 0
      %2237 = vmatprep.subr.bf16.mxu0 0
      %2238 = vmatpush1.bf16.msra.mxu0 0
      %2239 = vmatprep.subr.bf16.mxu0 0
      %2240 = vmatpush1.bf16.msra.mxu0 0
      %2241 = vmatprep.subr.bf16.mxu0 0
      %2242 = vmatpush1.bf16.msra.mxu0 0
      %2243 = vmatprep.subr.bf16.mxu0 0
      %2244 = vmatpush1.bf16.msra.mxu0 0
      %2245 = vmatprep.subr.bf16.mxu0 0
      %2246 = vmatpush1.bf16.msra.mxu0 0
      %2247 = vmatprep.subr.bf16.mxu0 0
      %2248 = vmatpush1.bf16.msra.mxu0 0
      %2249 = vmatprep.subr.bf16.mxu0 0
      %2250 = vmatpush1.bf16.msra.mxu0 0
      %2251 = vmatprep.subr.bf16.mxu0 0
      %2252 = vmatpush1.bf16.msra.mxu0 0
      %2253 = vmatprep.subr.bf16.mxu0 0
      %2254 = vmatpush1.bf16.msra.mxu0 0
      %2255 = vmatprep.mubr.bf16.mxu0 0
      %2256 = vmatmul.mubr.bf16.gmra.mrb[0].mxu0 %v2187
      %v2257 = vpop.f32.mrb[0].mxu0
      %v2258 = vadd.f32 %v2169, %v2257
      %v2259 = vpop.f32.mrb[0].mxu0
      %v2260 = vpop.f32.mrb[0].mxu0
      %v2261 = vadd.f32 %v2169, %v2260
      %v2262 = vpop.f32.mrb[0].mxu0
      %2263 = vmatprep.mubr.bf16.mxu0 0
      %2264 = vmatmul.mubr.bf16.gmra.mrb[0].mxu0 %v2189
      %v2265 = vpop.f32.mrb[0].mxu0
      %v2266 = vadd.f32 %v2169, %v2265
      %v2267 = vpop.f32.mrb[0].mxu0
      %v2268 = vpop.f32.mrb[0].mxu0
      %v2269 = vadd.f32 %v2169, %v2268
      %v2270 = vpop.f32.mrb[0].mxu0
      %2271 = vmatprep.mubr.bf16.mxu0 0
      %2272 = vmatmul.mubr.bf16.gmra.mrb[0].mxu0 %v2191
      %v2273 = vpop.f32.mrb[0].mxu0
      %v2274 = vadd.f32 %v2169, %v2273
      %v2275 = vpop.f32.mrb[0].mxu0
      %v2276 = vpop.f32.mrb[0].mxu0
      %v2277 = vadd.f32 %v2169, %v2276
      %v2278 = vpop.f32.mrb[0].mxu0
      %2279 = vmatprep.mubr.bf16.mxu0 0
      %2280 = vmatmul.mubr.bf16.gmra.mrb[0].mxu0 %v2193
      %v2281 = vpop.f32.mrb[0].mxu0
      %v2282 = vadd.f32 %v2169, %v2281
      %v2283 = vpop.f32.mrb[0].mxu0
      %v2284 = vpop.f32.mrb[0].mxu0
      %v2285 = vadd.f32 %v2169, %v2284
      %v2286 = vpop.f32.mrb[0].mxu0
      %2287 = vmatprep.mubr.bf16.mxu0 0
      %2288 = vmatmul.mubr.bf16.gmra.mrb[0].mxu0 %v2195
      %v2289 = vpop.f32.mrb[0].mxu0
      %v2290 = vadd.f32 %v2169, %v2289
      %v2291 = vpop.f32.mrb[0].mxu0
      %v2292 = vpop.f32.mrb[0].mxu0
      %v2293 = vadd.f32 %v2169, %v2292
      %v2294 = vpop.f32.mrb[0].mxu0
      %2295 = vmatprep.mubr.bf16.mxu0 0
      %2296 = vmatmul.mubr.bf16.gmra.mrb[0].mxu0 %v2197
      %v2297 = vpop.f32.mrb[0].mxu0
      %v2298 = vadd.f32 %v2169, %v2297
      %v2299 = vpop.f32.mrb[0].mxu0
      %v2300 = vpop.f32.mrb[0].mxu0
      %v2301 = vadd.f32 %v2169, %v2300
      %v2302 = vpop.f32.mrb[0].mxu0
      %2303 = vmatprep.mubr.bf16.mxu0 0
      %2304 = vmatmul.mubr.bf16.gmra.mrb[0].mxu0 %v2199
      %v2305 = vpop.f32.mrb[0].mxu0
      %v2306 = vadd.f32 %v2169, %v2305
      %v2307 = vpop.f32.mrb[0].mxu0
      %v2308 = vpop.f32.mrb[0].mxu0
      %v2309 = vadd.f32 %v2169, %v2308
      %v2310 = vpop.f32.mrb[0].mxu0
      %2311 = vmatprep.mubr.bf16.mxu0 0
      %2312 = vmatmul.mubr.bf16.gmra.mrb[0].mxu0 %v2201
      %v2313 = vpop.f32.mrb[0].mxu0
      %v2314 = vadd.f32 %v2169, %v2313
      %v2315 = vpop.f32.mrb[0].mxu0
      %v2316 = vpop.f32.mrb[0].mxu0
      %v2317 = vadd.f32 %v2169, %v2316
      %v2318 = vpop.f32.mrb[0].mxu0
      %2319 = vmatprep.mubr.bf16.mxu0 0
      %2320 = vmatmul.mubr.bf16.gmra.mrb[0].mxu0 %v2203
      %v2321 = vpop.f32.mrb[0].mxu0
      %v2322 = vadd.f32 %v2169, %v2321
      %v2323 = vpop.f32.mrb[0].mxu0
      %v2324 = vpop.f32.mrb[0].mxu0
      %v2325 = vadd.f32 %v2169, %v2324
      %v2326 = vpop.f32.mrb[0].mxu0
      %2327 = vmatprep.mubr.bf16.mxu0 0
      %2328 = vmatmul.mubr.bf16.gmra.mrb[0].mxu0 %v2205
      %v2329 = vpop.f32.mrb[0].mxu0
      %v2330 = vadd.f32 %v2169, %v2329
      %v2331 = vpop.f32.mrb[0].mxu0
      %v2332 = vpop.f32.mrb[0].mxu0
      %v2333 = vadd.f32 %v2169, %v2332
      %v2334 = vpop.f32.mrb[0].mxu0
      %2335 = vmatprep.mubr.bf16.mxu0 0
      %2336 = vmatmul.mubr.bf16.gmra.mrb[0].mxu0 %v2207
      %v2337 = vpop.f32.mrb[0].mxu0
      %v2338 = vadd.f32 %v2169, %v2337
      %v2339 = vpop.f32.mrb[0].mxu0
      %v2340 = vpop.f32.mrb[0].mxu0
      %v2341 = vadd.f32 %v2169, %v2340
      %v2342 = vpop.f32.mrb[0].mxu0
      %2343 = vmatprep.mubr.bf16.mxu0 0
      %2344 = vmatmul.mubr.bf16.gmra.mrb[0].mxu0 %v2209
      %v2345 = vpop.f32.mrb[0].mxu0
      %v2346 = vadd.f32 %v2169, %v2345
      %v2347 = vpop.f32.mrb[0].mxu0
      %v2348 = vpop.f32.mrb[0].mxu0
      %v2349 = vadd.f32 %v2169, %v2348
      %v2350 = vpop.f32.mrb[0].mxu0
      %2351 = vmatprep.mubr.bf16.mxu0 0
      %2352 = vmatmul.mubr.bf16.gmra.mrb[0].mxu0 %v2211
      %v2353 = vpop.f32.mrb[0].mxu0
      %v2354 = vadd.f32 %v2169, %v2353
      %v2355 = vpop.f32.mrb[0].mxu0
      %v2356 = vpop.f32.mrb[0].mxu0
      %v2357 = vadd.f32 %v2169, %v2356
      %v2358 = vpop.f32.mrb[0].mxu0
      %2359 = vmatprep.mubr.bf16.mxu0 0
      %2360 = vmatmul.mubr.bf16.gmra.mrb[0].mxu0 %v2213
      %v2361 = vpop.f32.mrb[0].mxu0
      %v2362 = vadd.f32 %v2169, %v2361
      %v2363 = vpop.f32.mrb[0].mxu0
      %v2364 = vpop.f32.mrb[0].mxu0
      %v2365 = vadd.f32 %v2169, %v2364
      %v2366 = vpop.f32.mrb[0].mxu0
      %2367 = vmatprep.mubr.bf16.mxu0 0
      %2368 = vmatmul.mubr.bf16.gmra.mrb[0].mxu0 %v2215
      %v2369 = vpop.f32.mrb[0].mxu0
      %v2370 = vadd.f32 %v2169, %v2369
      %v2371 = vpop.f32.mrb[0].mxu0
      %v2372 = vpop.f32.mrb[0].mxu0
      %v2373 = vadd.f32 %v2169, %v2372
      %v2374 = vpop.f32.mrb[0].mxu0
      %2375 = vmatprep.mubr.bf16.mxu0 0
      %2376 = vmatmul.mubr.bf16.gmra.mrb[0].mxu0 %v2217
      %v2377 = vpop.f32.mrb[0].mxu0
      %v2378 = vadd.f32 %v2169, %v2377
      %v2379 = vpop.f32.mrb[0].mxu0
      %v2380 = vpop.f32.mrb[0].mxu0
      %v2381 = vadd.f32 %v2169, %v2380
      %v2382 = vpop.f32.mrb[0].mxu0
      %2383 = vdwg.mxu0
      %v2384 = vmax.f32 %v2258, 0.0
      %v2385 = vmax.f32 %v2261, 0.0
      %v2386 = vmax.f32 %v2266, 0.0
      %v2387 = vmax.f32 %v2269, 0.0
      %v2388 = vmax.f32 %v2274, 0.0
      %v2389 = vmax.f32 %v2277, 0.0
      %v2390 = vmax.f32 %v2282, 0.0
      %v2391 = vmax.f32 %v2285, 0.0
      %v2392 = vmax.f32 %v2290, 0.0
      %v2393 = vmax.f32 %v2293, 0.0
      %v2394 = vmax.f32 %v2298, 0.0
      %v2395 = vmax.f32 %v2301, 0.0
      %v2396 = vmax.f32 %v2306, 0.0
      %v2397 = vmax.f32 %v2309, 0.0
      %v2398 = vmax.f32 %v2314, 0.0
      %v2399 = vmax.f32 %v2317, 0.0
      %v2400 = vmax.f32 %v2322, 0.0
      %v2401 = vmax.f32 %v2325, 0.0
      %v2402 = vmax.f32 %v2330, 0.0
      %v2403 = vmax.f32 %v2333, 0.0
      %v2404 = vmax.f32 %v2338, 0.0
      %v2405 = vmax.f32 %v2341, 0.0
      %v2406 = vmax.f32 %v2346, 0.0
      %v2407 = vmax.f32 %v2349, 0.0
      %v2408 = vmax.f32 %v2354, 0.0
      %v2409 = vmax.f32 %v2357, 0.0
      %v2410 = vmax.f32 %v2362, 0.0
      %v2411 = vmax.f32 %v2365, 0.0
      %v2412 = vmax.f32 %v2370, 0.0
      %v2413 = vmax.f32 %v2373, 0.0
      %v2414 = vmax.f32 %v2378, 0.0
      %v2415 = vmax.f32 %v2381, 0.0
      %2416 = vst [vmem:[%s192] sm:$0xff] %v2384
      %2417 = vst [vmem:[%s192 + $0x8] sm:$0xff] %v2385
      %2418 = vst [vmem:[%s192 + $0x10] sm:$0xff] %v2386
      %2419 = vst [vmem:[%s192 + $0x18] sm:$0xff] %v2387
      %2420 = vst [vmem:[%s192 + $0x20] sm:$0xff] %v2388
      %2421 = vst [vmem:[%s192 + $0x28] sm:$0xff] %v2389
      %2422 = vst [vmem:[%s192 + $0x30] sm:$0xff] %v2390
      %2423 = vst [vmem:[%s192 + $0x38] sm:$0xff] %v2391
      %2424 = vst [vmem:[%s192 + $0x40] sm:$0xff] %v2392
      %2425 = vst [vmem:[%s192 + $0x48] sm:$0xff] %v2393
      %2426 = vst [vmem:[%s192 + $0x50] sm:$0xff] %v2394
      %2427 = vst [vmem:[%s192 + $0x58] sm:$0xff] %v2395
      %2428 = vst [vmem:[%s192 + $0x60] sm:$0xff] %v2396
      %2429 = vst [vmem:[%s192 + $0x68] sm:$0xff] %v2397
      %2430 = vst [vmem:[%s192 + $0x70] sm:$0xff] %v2398
      %2431 = vst [vmem:[%s192 + $0x78] sm:$0xff] %v2399
      %2432 = vst [vmem:[%s192 + $0x80] sm:$0xff] %v2400
      %2433 = vst [vmem:[%s192 + $0x88] sm:$0xff] %v2401
      %2434 = vst [vmem:[%s192 + $0x90] sm:$0xff] %v2402
      %2435 = vst [vmem:[%s192 + $0x98] sm:$0xff] %v2403
      %2436 = vst [vmem:[%s192 + $0xa0] sm:$0xff] %v2404
      %2437 = vst [vmem:[%s192 + $0xa8] sm:$0xff] %v2405
      %2438 = vst [vmem:[%s192 + $0xb0] sm:$0xff] %v2406
      %2439 = vst [vmem:[%s192 + $0xb8] sm:$0xff] %v2407
      %2440 = vst [vmem:[%s192 + $0xc0] sm:$0xff] %v2408
      %2441 = vst [vmem:[%s192 + $0xc8] sm:$0xff] %v2409
      %2442 = vst [vmem:[%s192 + $0xd0] sm:$0xff] %v2410
      %2443 = vst [vmem:[%s192 + $0xd8] sm:$0xff] %v2411
      %2444 = vst [vmem:[%s192 + $0xe0] sm:$0xff] %v2412
      %2445 = vst [vmem:[%s192 + $0xe8] sm:$0xff] %v2413
      %2446 = vst [vmem:[%s192 + $0xf0] sm:$0xff] %v2414
      %2447 = vst [vmem:[%s192 + $0xf8] sm:$0xff] %v2415
      %s2448 = smul.u32 32, %s19
      %p2449 = scmp.lt.s32.totalorder %s18, 1
      %s2450 = scalar_select %p2449, %s18, 1
      %p2451 = scmp.lt.s32.totalorder %s2448, 31
      %s2452 = scalar_select %p2451, %s2448, 31
      %s2453 = smul.addr %s2450, 32
      %s2454 = sadd.s32 %s2452, %s2453
      %s2455 = smul.addr %s2454, 8
      %s2456 = scalar_lea.vmem %s3, %s2455
      // Predicated region
      $region33: #{conv_block_forward.1} parent=31 // pred_check
        %p2457 = pneg %p114
      $region34: #{conv_block_forward.1} parent=31 // pred_check_branch
        %2459 = sbr.rel (%p2457) target = $region36
      $region35: #{conv_block_forward.1} parent=31 // pred_region
        %s2460 = smul.u32 32, %s19
      $region36: #{conv_block_forward.1} parent=31 // pred_fallthru
        _
    $region32: #{conv_block_forward.1} parent=5 // pred_fallthru
      _
    %p2461 = scmp.le.s32.totalorder 2, %s9
    // Predicated region
    $region37: #{conv_block_forward.1} parent=5 // pred_check
      %p2462 = pneg %p2461
    $region38: #{conv_block_forward.1} parent=5 // pred_check_branch
      %2464 = sbr.rel (%p2462) target = $region40
    $region39: #{conv_block_forward.1} parent=5 // pred_region
      %s2465 = ssub.s32 %s9, 2
      // Predicated region
      $region41: #{conv_block_forward.1} parent=39 // pred_check
        %p2466 = pneg %p120
      $region42: #{conv_block_forward.1} parent=39 // pred_check_branch
        %2468 = sbr.rel (%p2466) target = $region44
      $region43: #{conv_block_forward.1} parent=39 // pred_region
        %s2469 = smul.u32 32, %s21
        %p2470 = scmp.lt.s32.totalorder %s20, 1
        %s2471 = scalar_select %p2470, %s20, 1
        %p2472 = scmp.lt.s32.totalorder %s2469, 31
        %s2473 = scalar_select %p2472, %s2469, 31
        %s2474 = smul.addr %s2471, 32
        %s2475 = sadd.s32 %s2473, %s2474
        %s2476 = smul.addr %s2475, 8
        %s2477 = scalar_lea.vmem %s3, %s2476
      $region44: #{conv_block_forward.1} parent=39 // pred_fallthru
        _
    $region40: #{conv_block_forward.1} parent=5 // pred_fallthru
      _
  $region6: #{conv_block_forward.1} parent=0 // loop_footer
    %s13 = sadd.s32 1, %s9
  $region7: #{conv_block_forward.1} parent=0 // loop_footer_branch
    %8 = sbr.rel target = $region3
  $region8: #{conv_block_forward.1} parent=0 // loop_exit
    _

</llo_original>
